<compile_context>
chip_gen: v7x
topology: tpu7x:2x2x1
jax: 0.10.0
libtpu: 0.0.40
codegen_flags: <defaults>
</compile_context>

<pallas_src>
import numpy as np
import jax
import jax.numpy as jnp
from jax.experimental import pallas as pl
from jax.experimental.pallas import tpu as pltpu


def bilstm_kernel(x_ref, lens_ref, wih_ref, whhf_ref, whhb_ref, b_ref,
                  of_ref, ob_ref, xp_ref):
    """Single-invocation bidirectional LSTM forward.

    x_ref    : [T*Bp, E]   bf16 time-major input, flattened over (T, Bp)
    lens_ref : [Bp, 1]     int32 sequence lengths (padded rows have len 0)
    wih_ref  : [E, 8H]     bf16 concat(W_ih_fwd, W_ih_bwd), gate order i,f,o,g
    whhf_ref : [H, 4H]     bf16 W_hh_fwd (gate order i,f,o,g)
    whhb_ref : [H, 4H]     bf16 W_hh_bwd
    b_ref    : [1, 8H]     f32 concat(b_fwd, b_bwd) (b_ih + b_hh pre-summed)
    of_ref   : [T, Bp, H]  f32 forward-direction outputs (kernel output)
    ob_ref   : [T, Bp, H]  f32 backward-direction outputs (kernel output)
    xp_ref   : [T*Bp, 8H]  f32 VMEM scratch: staged input projection
    """
    T, Bp, H = of_ref.shape
    G = 4 * H                                  # gate width per direction

    # Hoisted, time-independent input projection for BOTH directions, staged
    # into VMEM scratch (not held live in vregs across the unrolled loop).
    xp_ref[...] = (
        jnp.dot(x_ref[...], wih_ref[...], preferred_element_type=jnp.float32)
        + b_ref[...])

    whh_f = whhf_ref[...]                      # [H, 4H] bf16, read once
    whh_b = whhb_ref[...]                      # [H, 4H] bf16

    # Hoisted validity mask: valid[b, t] == (t < lens[b]).  One compare total.
    valid = (jax.lax.broadcasted_iota(jnp.int32, (Bp, T), 1)
             < lens_ref[...])                  # [Bp, T] bool

    # Recurrent state lives in vregs (loop-carried; no VMEM round trip).
    h_f = jnp.zeros((Bp, H), jnp.float32)
    c_f = jnp.zeros((Bp, H), jnp.float32)
    h_b = jnp.zeros((Bp, H), jnp.float32)
    c_b = jnp.zeros((Bp, H), jnp.float32)

    def cell(gates, c_old):
        # Packed gate order [i | f | o | g]: one contiguous sigmoid dispatch
        # over 3H lanes, one tanh over the remaining H lanes.
        sig = jax.nn.sigmoid(gates[:, 0:3 * H])
        g = jnp.tanh(gates[:, 3 * H:4 * H])
        i = sig[:, 0:H]
        f = sig[:, H:2 * H]
        o = sig[:, 2 * H:3 * H]
        c_new = f * c_old + i * g
        h_new = o * jnp.tanh(c_new)
        return h_new, c_new

    # T is small & static: fully unrolled recurrence.
    # TODO(synk): lax.fori_loop + time-chunked grid for production T.
    for s in range(T):
        tb = T - 1 - s                         # backward direction's timestep

        # Per-direction recurrent matmuls: bf16 in, f32 accumulate.  No lane
        # concat and no block-diagonal zero FLOPs on the serial path.
        gates_f = (xp_ref[s * Bp:(s + 1) * Bp, 0:G]
                   + jnp.dot(h_f.astype(jnp.bfloat16), whh_f,
                             preferred_element_type=jnp.float32))
        gates_b = (xp_ref[tb * Bp:(tb + 1) * Bp, G:2 * G]
                   + jnp.dot(h_b.astype(jnp.bfloat16), whh_b,
                             preferred_element_type=jnp.float32))

        hf_new, cf_new = cell(gates_f, c_f)
        hb_new, cb_new = cell(gates_b, c_b)

        m_f = valid[:, s:s + 1]                # [Bp, 1] bool
        m_b = valid[:, tb:tb + 1]

        h_f = jnp.where(m_f, hf_new, h_f)
        c_f = jnp.where(m_f, cf_new, c_f)
        h_b = jnp.where(m_b, hb_new, h_b)
        c_b = jnp.where(m_b, cb_new, c_b)

        # Aligned per-step writes directly into the two output buffers (no
        # end-of-kernel concat / extra copy pass).  Padded timesteps -> 0
        # (pad_packed_sequence semantics).
        of_ref[s] = jnp.where(m_f, hf_new, 0.0)
        ob_ref[tb] = jnp.where(m_b, hb_new, 0.0)


def encoder_forward(x, lens, rev_ix_sort, params):
    """x: [T, B, E] float32 (length-sorted, padded). Returns [B, T, 2H]."""
    T, B, E = x.shape
    H = params["w_hh_f"].shape[0]
    Bp = ((B + 7) // 8) * 8                    # pad batch to full sublane tiles

    # Pad batch (padded rows get length 0 -> never update, outputs forced 0).
    x_p = jnp.pad(x, ((0, 0), (0, Bp - B), (0, 0)))
    lens_p = jnp.pad(lens.astype(jnp.int32), (0, Bp - B))

    x2 = x_p.reshape(T * Bp, E).astype(jnp.bfloat16)   # metadata reshape + cast
    lens2d = lens_p.reshape(Bp, 1)

    def reorder(w):
        # PyTorch gate order [i|f|g|o] -> kernel order [i|f|o|g]
        return jnp.concatenate(
            [w[:, 0:2 * H], w[:, 3 * H:4 * H], w[:, 2 * H:3 * H]], axis=1)

    # Packed weights (done once, outside the serial recurrence), bf16 for MXU.
    wih_all = jnp.concatenate(
        [reorder(params["w_ih_f"]), reorder(params["w_ih_b"])],
        axis=1).astype(jnp.bfloat16)                         # [E, 8H]
    whh_f = reorder(params["w_hh_f"]).astype(jnp.bfloat16)   # [H, 4H]
    whh_b = reorder(params["w_hh_b"]).astype(jnp.bfloat16)   # [H, 4H]
    b_all = jnp.concatenate(
        [reorder(params["b_f"]), reorder(params["b_b"])], axis=1)  # [1, 8H] f32

    vmem = pl.BlockSpec(memory_space=pltpu.MemorySpace.VMEM)

    of, ob = pl.pallas_call(
        bilstm_kernel,
        out_shape=(jax.ShapeDtypeStruct((T, Bp, H), jnp.float32),
                   jax.ShapeDtypeStruct((T, Bp, H), jnp.float32)),
        in_specs=[vmem] * 6,
        out_specs=(vmem, vmem),
        scratch_shapes=[pltpu.VMEM((T * Bp, 8 * H), jnp.float32)],
        compiler_params=pltpu.CompilerParams(vmem_limit_bytes=32 * 1024 * 1024),
    )(x2, lens2d, wih_all, whh_f, whh_b, b_all)

    # Feature concat + batch un-pad happen once, outside the serial kernel.
    out = jnp.concatenate([of, ob], axis=-1)[:, :B]    # [T, B, 2H]
    out = jnp.transpose(out, (1, 0, 2))                # [B, T, 2H] (rev_sort permute)
    out = out[rev_ix_sort]                             # realign with labels
    return out


def ref_encoder(x, lens, rev_ix_sort, params):
    """Pure-JAX reference with matched matmul precision (bf16 in / f32 acc)."""
    T, B, E = x.shape
    H = params["w_hh_f"].shape[0]
    bf = jnp.bfloat16

    def cell(x_t, h, c, wih, whh, b):
        gates = (jnp.dot(x_t.astype(bf), wih.astype(bf),
                         preferred_element_type=jnp.float32)
                 + jnp.dot(h.astype(bf), whh.astype(bf),
                           preferred_element_type=jnp.float32)
                 + b)
        i = jax.nn.sigmoid(gates[:, :H])
        f = jax.nn.sigmoid(gates[:, H:2 * H])
        g = jnp.tanh(gates[:, 2 * H:3 * H])
        o = jax.nn.sigmoid(gates[:, 3 * H:])
        c_new = f * c + i * g
        return o * jnp.tanh(c_new), c_new

    hf = jnp.zeros((B, H)); cf = jnp.zeros((B, H)); outs_f = []
    for t in range(T):
        m = (lens > t).astype(jnp.float32)[:, None]
        hn, cn = cell(x[t], hf, cf, params["w_ih_f"], params["w_hh_f"], params["b_f"])
        hf = m * hn + (1 - m) * hf
        cf = m * cn + (1 - m) * cf
        outs_f.append(m * hn)

    hb = jnp.zeros((B, H)); cb = jnp.zeros((B, H)); outs_b = [None] * T
    for s in range(T):
        t = T - 1 - s
        m = (lens > t).astype(jnp.float32)[:, None]
        hn, cn = cell(x[t], hb, cb, params["w_ih_b"], params["w_hh_b"], params["b_b"])
        hb = m * hn + (1 - m) * hb
        cb = m * cn + (1 - m) * cb
        outs_b[t] = m * hn

    out = jnp.concatenate([jnp.stack(outs_f), jnp.stack(outs_b)], axis=-1)
    return jnp.transpose(out, (1, 0, 2))[rev_ix_sort]


def init_params(key, embed_size, hidden_size):
    """Deterministic PyTorch-style LSTM init: U(-1/sqrt(H), 1/sqrt(H))."""
    k = 1.0 / np.sqrt(hidden_size)
    keys = jax.random.split(key, 8)

    def u(kk, shape):
        return jax.random.uniform(kk, shape, jnp.float32, -k, k)

    return {
        # stored pre-transposed: x @ W_ih, h @ W_hh; gate order i, f, g, o
        "w_ih_f": u(keys[0], (embed_size, 4 * hidden_size)),
        "w_hh_f": u(keys[1], (hidden_size, 4 * hidden_size)),
        "b_f":    u(keys[2], (1, 4 * hidden_size)) + u(keys[3], (1, 4 * hidden_size)),
        "w_ih_b": u(keys[4], (embed_size, 4 * hidden_size)),
        "w_hh_b": u(keys[5], (hidden_size, 4 * hidden_size)),
        "b_b":    u(keys[6], (1, 4 * hidden_size)) + u(keys[7], (1, 4 * hidden_size)),
    }


if __name__ == "__main__":
    # config: embed_size=16, encoder_size=32, encoder_layers=1,
    #         bidirectional=True, p_drop_rnn=0.0 (inference: dropout is identity)
    T, B, E, H = 8, 4, 16, 32

    key = jax.random.PRNGKey(0)
    k_x, k_p = jax.random.split(key)

    # sents.sents: [timesteps, batch, embed], length-sorted (descending)
    x = jax.random.normal(k_x, (T, B, E), jnp.float32)
    lens = jnp.array([8, 7, 5, 3], dtype=jnp.int32)          # sorted by length
    rev_ix_sort = jnp.array([2, 0, 3, 1], dtype=jnp.int32)   # realignment permutation

    # zero out padded timesteps (pack_padded_sequence never reads them)
    t_idx = jnp.arange(T)[:, None, None]
    x = jnp.where(t_idx < lens[None, :, None], x, 0.0)

    params = init_params(k_p, E, H)

    fwd = jax.jit(encoder_forward)
    out = fwd(x, lens, rev_ix_sort, params)
    out = jax.block_until_ready(out)

    ref = ref_encoder(x, lens, rev_ix_sort, params)
    # bf16 matmul inputs (matched in the reference) -> loosened tolerances.
    np.testing.assert_allclose(np.asarray(out), np.asarray(ref),
                               rtol=1e-2, atol=1e-2)

    # TODO(synk): p_drop_rnn (recurrent dropout) is a no-op at inference and is
    # not modeled here.
    print("KERNEL_OK")
</pallas_src>

<mosaic_0001>
module attributes {stable_mosaic.version = 11 : i64} {
  func.func @bilstm_kernel(%arg0: memref<64x16xbf16, #tpu.memory_space<vmem>>, %arg1: memref<8x1xi32, #tpu.memory_space<vmem>>, %arg2: memref<16x256xbf16, #tpu.memory_space<vmem>>, %arg3: memref<32x128xbf16, #tpu.memory_space<vmem>>, %arg4: memref<32x128xbf16, #tpu.memory_space<vmem>>, %arg5: memref<1x256xf32, #tpu.memory_space<vmem>>, %arg6: memref<8x8x32xf32, #tpu.memory_space<vmem>>, %arg7: memref<8x8x32xf32, #tpu.memory_space<vmem>>, %arg8: memref<64x256xf32, #tpu.memory_space<vmem>>) attributes {dimension_semantics = [], scalar_prefetch = 0 : i64, scratch_operands = 1 : i64, tpu.core_type = #tpu.core_type<tc>} {
    %c0 = arith.constant 0 : index
    %c0_0 = arith.constant 0 : index
    %0 = vector.load %arg0[%c0, %c0_0] : memref<64x16xbf16, #tpu.memory_space<vmem>>, vector<64x16xbf16>
    %c0_1 = arith.constant 0 : index
    %c0_2 = arith.constant 0 : index
    %1 = vector.load %arg2[%c0_1, %c0_2] : memref<16x256xbf16, #tpu.memory_space<vmem>>, vector<16x256xbf16>
    %cst = arith.constant dense<0.000000e+00> : vector<64x256xf32>
    %2 = tpu.matmul %0, %1, %cst {dimension_numbers = #tpu.dot_dimension_numbers<[1], [0], [0], [1], [0, 0, 1, 1], [], []>} : vector<64x16xbf16>, vector<16x256xbf16>, vector<64x256xf32> -> vector<64x256xf32>
    %c0_3 = arith.constant 0 : index
    %c0_4 = arith.constant 0 : index
    %3 = vector.load %arg5[%c0_3, %c0_4] : memref<1x256xf32, #tpu.memory_space<vmem>>, vector<1x256xf32>
    %4 = vector.broadcast %3 : vector<1x256xf32> to vector<64x256xf32>
    %5 = arith.addf %2, %4 : vector<64x256xf32>
    %c0_5 = arith.constant 0 : index
    %c0_6 = arith.constant 0 : index
    %6 = vector.load %arg8[%c0_5, %c0_6] : memref<64x256xf32, #tpu.memory_space<vmem>>, vector<64x256xf32>
    tpu.vector_store %arg8[%c0_5, %c0_6], %5 {strides = array<i32>} : memref<64x256xf32, #tpu.memory_space<vmem>>, vector<64x256xf32>,
    %c0_7 = arith.constant 0 : index
    %c0_8 = arith.constant 0 : index
    %7 = vector.load %arg3[%c0_7, %c0_8] : memref<32x128xbf16, #tpu.memory_space<vmem>>, vector<32x128xbf16>
    %c0_9 = arith.constant 0 : index
    %c0_10 = arith.constant 0 : index
    %8 = vector.load %arg4[%c0_9, %c0_10] : memref<32x128xbf16, #tpu.memory_space<vmem>>, vector<32x128xbf16>
    %9 = tpu.iota {dimensions = array<i32: 1>} : vector<8x8xi32>
    %c0_11 = arith.constant 0 : index
    %c0_12 = arith.constant 0 : index
    %10 = vector.load %arg1[%c0_11, %c0_12] : memref<8x1xi32, #tpu.memory_space<vmem>>, vector<8x1xi32>
    %11 = vector.broadcast %10 : vector<8x1xi32> to vector<8x8xi32>
    %12 = arith.cmpi slt, %9, %11 : vector<8x8xi32>
    %cst_13 = arith.constant 0.000000e+00 : f32
    %13 = vector.broadcast %cst_13 : f32 to vector<8x32xf32>
    %cst_14 = arith.constant 0.000000e+00 : f32
    %14 = vector.broadcast %cst_14 : f32 to vector<8x32xf32>
    %cst_15 = arith.constant 0.000000e+00 : f32
    %15 = vector.broadcast %cst_15 : f32 to vector<8x32xf32>
    %cst_16 = arith.constant 0.000000e+00 : f32
    %16 = vector.broadcast %cst_16 : f32 to vector<8x32xf32>
    %c0_17 = arith.constant 0 : index
    %c0_18 = arith.constant 0 : index
    %17 = vector.load %arg8[%c0_17, %c0_18] : memref<64x256xf32, #tpu.memory_space<vmem>>, vector<8x128xf32>
    %18 = arith.truncf %13 : vector<8x32xf32> to vector<8x32xbf16>
    %cst_19 = arith.constant dense<0.000000e+00> : vector<8x128xf32>
    %19 = tpu.matmul %18, %7, %cst_19 {dimension_numbers = #tpu.dot_dimension_numbers<[1], [0], [0], [1], [0, 0, 1, 1], [], []>} : vector<8x32xbf16>, vector<32x128xbf16>, vector<8x128xf32> -> vector<8x128xf32>
    %20 = arith.addf %17, %19 : vector<8x128xf32>
    %c56 = arith.constant 56 : index
    %c128 = arith.constant 128 : index
    %21 = vector.load %arg8[%c56, %c128] : memref<64x256xf32, #tpu.memory_space<vmem>>, vector<8x128xf32>
    %22 = arith.truncf %15 : vector<8x32xf32> to vector<8x32xbf16>
    %cst_20 = arith.constant dense<0.000000e+00> : vector<8x128xf32>
    %23 = tpu.matmul %22, %8, %cst_20 {dimension_numbers = #tpu.dot_dimension_numbers<[1], [0], [0], [1], [0, 0, 1, 1], [], []>} : vector<8x32xbf16>, vector<32x128xbf16>, vector<8x128xf32> -> vector<8x128xf32>
    %24 = arith.addf %21, %23 : vector<8x128xf32>
    %25 = vector.extract_strided_slice %20 {offsets = [0, 0], sizes = [8, 96], strides = [1, 1]} : vector<8x128xf32> to vector<8x96xf32>
    %26 = arith.negf %25 : vector<8x96xf32>
    %27 = math.exp %26 : vector<8x96xf32>
    %cst_21 = arith.constant 1.000000e+00 : f32
    %28 = vector.broadcast %cst_21 : f32 to vector<8x96xf32>
    %29 = arith.addf %28, %27 : vector<8x96xf32>
    %30 = arith.divf %28, %29 : vector<8x96xf32>
    %31 = vector.extract_strided_slice %20 {offsets = [0, 96], sizes = [8, 32], strides = [1, 1]} : vector<8x128xf32> to vector<8x32xf32>
    %32 = math.tanh %31 : vector<8x32xf32>
    %33 = vector.extract_strided_slice %30 {offsets = [0, 0], sizes = [8, 32], strides = [1, 1]} : vector<8x96xf32> to vector<8x32xf32>
    %34 = vector.extract_strided_slice %30 {offsets = [0, 32], sizes = [8, 32], strides = [1, 1]} : vector<8x96xf32> to vector<8x32xf32>
    %35 = vector.extract_strided_slice %30 {offsets = [0, 64], sizes = [8, 32], strides = [1, 1]} : vector<8x96xf32> to vector<8x32xf32>
    %36 = arith.mulf %34, %14 : vector<8x32xf32>
    %37 = arith.mulf %33, %32 : vector<8x32xf32>
    %38 = arith.addf %36, %37 : vector<8x32xf32>
    %39 = math.tanh %38 : vector<8x32xf32>
    %40 = arith.mulf %35, %39 : vector<8x32xf32>
    %41 = vector.extract_strided_slice %24 {offsets = [0, 0], sizes = [8, 96], strides = [1, 1]} : vector<8x128xf32> to vector<8x96xf32>
    %42 = arith.negf %41 : vector<8x96xf32>
    %43 = math.exp %42 : vector<8x96xf32>
    %cst_22 = arith.constant 1.000000e+00 : f32
    %44 = vector.broadcast %cst_22 : f32 to vector<8x96xf32>
    %45 = arith.addf %44, %43 : vector<8x96xf32>
    %46 = arith.divf %44, %45 : vector<8x96xf32>
    %47 = vector.extract_strided_slice %24 {offsets = [0, 96], sizes = [8, 32], strides = [1, 1]} : vector<8x128xf32> to vector<8x32xf32>
    %48 = math.tanh %47 : vector<8x32xf32>
    %49 = vector.extract_strided_slice %46 {offsets = [0, 0], sizes = [8, 32], strides = [1, 1]} : vector<8x96xf32> to vector<8x32xf32>
    %50 = vector.extract_strided_slice %46 {offsets = [0, 32], sizes = [8, 32], strides = [1, 1]} : vector<8x96xf32> to vector<8x32xf32>
    %51 = vector.extract_strided_slice %46 {offsets = [0, 64], sizes = [8, 32], strides = [1, 1]} : vector<8x96xf32> to vector<8x32xf32>
    %52 = arith.mulf %50, %16 : vector<8x32xf32>
    %53 = arith.mulf %49, %48 : vector<8x32xf32>
    %54 = arith.addf %52, %53 : vector<8x32xf32>
    %55 = math.tanh %54 : vector<8x32xf32>
    %56 = arith.mulf %51, %55 : vector<8x32xf32>
    %57 = vector.extract_strided_slice %12 {offsets = [0, 0], sizes = [8, 1], strides = [1, 1]} : vector<8x8xi1> to vector<8x1xi1>
    %58 = vector.extract_strided_slice %12 {offsets = [0, 7], sizes = [8, 1], strides = [1, 1]} : vector<8x8xi1> to vector<8x1xi1>
    %59 = vector.shape_cast %57 : vector<8x1xi1> to vector<8x1xi1>
    %60 = vector.broadcast %59 : vector<8x1xi1> to vector<8x32xi1>
    %61 = arith.select %60, %40, %13 : vector<8x32xi1>, vector<8x32xf32>
    %62 = vector.shape_cast %57 : vector<8x1xi1> to vector<8x1xi1>
    %63 = vector.broadcast %62 : vector<8x1xi1> to vector<8x32xi1>
    %64 = arith.select %63, %38, %14 : vector<8x32xi1>, vector<8x32xf32>
    %65 = vector.shape_cast %58 : vector<8x1xi1> to vector<8x1xi1>
    %66 = vector.broadcast %65 : vector<8x1xi1> to vector<8x32xi1>
    %67 = arith.select %66, %56, %15 : vector<8x32xi1>, vector<8x32xf32>
    %68 = vector.shape_cast %58 : vector<8x1xi1> to vector<8x1xi1>
    %69 = vector.broadcast %68 : vector<8x1xi1> to vector<8x32xi1>
    %70 = arith.select %69, %54, %16 : vector<8x32xi1>, vector<8x32xf32>
    %cst_23 = arith.constant 0.000000e+00 : f32
    %71 = vector.shape_cast %57 : vector<8x1xi1> to vector<8x1xi1>
    %72 = vector.broadcast %71 : vector<8x1xi1> to vector<8x32xi1>
    %73 = vector.broadcast %cst_23 : f32 to vector<8x32xf32>
    %74 = arith.select %72, %40, %73 : vector<8x32xi1>, vector<8x32xf32>
    %c0_24 = arith.constant 0 : index
    %c0_25 = arith.constant 0 : index
    %c0_26 = arith.constant 0 : index
    %75 = vector.load %arg6[%c0_24, %c0_25, %c0_26] : memref<8x8x32xf32, #tpu.memory_space<vmem>>, vector<1x8x32xf32>
    %76 = vector.shape_cast %75 : vector<1x8x32xf32> to vector<8x32xf32>
    %77 = vector.shape_cast %74 : vector<8x32xf32> to vector<1x8x32xf32>
    tpu.vector_store %arg6[%c0_24, %c0_25, %c0_26], %77 {strides = array<i32>} : memref<8x8x32xf32, #tpu.memory_space<vmem>>, vector<1x8x32xf32>,
    %cst_27 = arith.constant 0.000000e+00 : f32
    %78 = vector.shape_cast %58 : vector<8x1xi1> to vector<8x1xi1>
    %79 = vector.broadcast %78 : vector<8x1xi1> to vector<8x32xi1>
    %80 = vector.broadcast %cst_27 : f32 to vector<8x32xf32>
    %81 = arith.select %79, %56, %80 : vector<8x32xi1>, vector<8x32xf32>
    %c7 = arith.constant 7 : index
    %c0_28 = arith.constant 0 : index
    %c0_29 = arith.constant 0 : index
    %82 = vector.load %arg7[%c7, %c0_28, %c0_29] : memref<8x8x32xf32, #tpu.memory_space<vmem>>, vector<1x8x32xf32>
    %83 = vector.shape_cast %82 : vector<1x8x32xf32> to vector<8x32xf32>
    %84 = vector.shape_cast %81 : vector<8x32xf32> to vector<1x8x32xf32>
    tpu.vector_store %arg7[%c7, %c0_28, %c0_29], %84 {strides = array<i32>} : memref<8x8x32xf32, #tpu.memory_space<vmem>>, vector<1x8x32xf32>,
    %c8 = arith.constant 8 : index
    %c0_30 = arith.constant 0 : index
    %85 = vector.load %arg8[%c8, %c0_30] : memref<64x256xf32, #tpu.memory_space<vmem>>, vector<8x128xf32>
    %86 = arith.truncf %61 : vector<8x32xf32> to vector<8x32xbf16>
    %cst_31 = arith.constant dense<0.000000e+00> : vector<8x128xf32>
    %87 = tpu.matmul %86, %7, %cst_31 {dimension_numbers = #tpu.dot_dimension_numbers<[1], [0], [0], [1], [0, 0, 1, 1], [], []>} : vector<8x32xbf16>, vector<32x128xbf16>, vector<8x128xf32> -> vector<8x128xf32>
    %88 = arith.addf %85, %87 : vector<8x128xf32>
    %c48 = arith.constant 48 : index
    %c128_32 = arith.constant 128 : index
    %89 = vector.load %arg8[%c48, %c128_32] : memref<64x256xf32, #tpu.memory_space<vmem>>, vector<8x128xf32>
    %90 = arith.truncf %67 : vector<8x32xf32> to vector<8x32xbf16>
    %cst_33 = arith.constant dense<0.000000e+00> : vector<8x128xf32>
    %91 = tpu.matmul %90, %8, %cst_33 {dimension_numbers = #tpu.dot_dimension_numbers<[1], [0], [0], [1], [0, 0, 1, 1], [], []>} : vector<8x32xbf16>, vector<32x128xbf16>, vector<8x128xf32> -> vector<8x128xf32>
    %92 = arith.addf %89, %91 : vector<8x128xf32>
    %93 = vector.extract_strided_slice %88 {offsets = [0, 0], sizes = [8, 96], strides = [1, 1]} : vector<8x128xf32> to vector<8x96xf32>
    %94 = arith.negf %93 : vector<8x96xf32>
    %95 = math.exp %94 : vector<8x96xf32>
    %cst_34 = arith.constant 1.000000e+00 : f32
    %96 = vector.broadcast %cst_34 : f32 to vector<8x96xf32>
    %97 = arith.addf %96, %95 : vector<8x96xf32>
    %98 = arith.divf %96, %97 : vector<8x96xf32>
    %99 = vector.extract_strided_slice %88 {offsets = [0, 96], sizes = [8, 32], strides = [1, 1]} : vector<8x128xf32> to vector<8x32xf32>
    %100 = math.tanh %99 : vector<8x32xf32>
    %101 = vector.extract_strided_slice %98 {offsets = [0, 0], sizes = [8, 32], strides = [1, 1]} : vector<8x96xf32> to vector<8x32xf32>
    %102 = vector.extract_strided_slice %98 {offsets = [0, 32], sizes = [8, 32], strides = [1, 1]} : vector<8x96xf32> to vector<8x32xf32>
    %103 = vector.extract_strided_slice %98 {offsets = [0, 64], sizes = [8, 32], strides = [1, 1]} : vector<8x96xf32> to vector<8x32xf32>
    %104 = arith.mulf %102, %64 : vector<8x32xf32>
    %105 = arith.mulf %101, %100 : vector<8x32xf32>
    %106 = arith.addf %104, %105 : vector<8x32xf32>
    %107 = math.tanh %106 : vector<8x32xf32>
    %108 = arith.mulf %103, %107 : vector<8x32xf32>
    %109 = vector.extract_strided_slice %92 {offsets = [0, 0], sizes = [8, 96], strides = [1, 1]} : vector<8x128xf32> to vector<8x96xf32>
    %110 = arith.negf %109 : vector<8x96xf32>
    %111 = math.exp %110 : vector<8x96xf32>
    %cst_35 = arith.constant 1.000000e+00 : f32
    %112 = vector.broadcast %cst_35 : f32 to vector<8x96xf32>
    %113 = arith.addf %112, %111 : vector<8x96xf32>
    %114 = arith.divf %112, %113 : vector<8x96xf32>
    %115 = vector.extract_strided_slice %92 {offsets = [0, 96], sizes = [8, 32], strides = [1, 1]} : vector<8x128xf32> to vector<8x32xf32>
    %116 = math.tanh %115 : vector<8x32xf32>
    %117 = vector.extract_strided_slice %114 {offsets = [0, 0], sizes = [8, 32], strides = [1, 1]} : vector<8x96xf32> to vector<8x32xf32>
    %118 = vector.extract_strided_slice %114 {offsets = [0, 32], sizes = [8, 32], strides = [1, 1]} : vector<8x96xf32> to vector<8x32xf32>
    %119 = vector.extract_strided_slice %114 {offsets = [0, 64], sizes = [8, 32], strides = [1, 1]} : vector<8x96xf32> to vector<8x32xf32>
    %120 = arith.mulf %118, %70 : vector<8x32xf32>
    %121 = arith.mulf %117, %116 : vector<8x32xf32>
    %122 = arith.addf %120, %121 : vector<8x32xf32>
    %123 = math.tanh %122 : vector<8x32xf32>
    %124 = arith.mulf %119, %123 : vector<8x32xf32>
    %125 = vector.extract_strided_slice %12 {offsets = [0, 1], sizes = [8, 1], strides = [1, 1]} : vector<8x8xi1> to vector<8x1xi1>
    %126 = vector.extract_strided_slice %12 {offsets = [0, 6], sizes = [8, 1], strides = [1, 1]} : vector<8x8xi1> to vector<8x1xi1>
    %127 = vector.shape_cast %125 : vector<8x1xi1> to vector<8x1xi1>
    %128 = vector.broadcast %127 : vector<8x1xi1> to vector<8x32xi1>
    %129 = arith.select %128, %108, %61 : vector<8x32xi1>, vector<8x32xf32>
    %130 = vector.shape_cast %125 : vector<8x1xi1> to vector<8x1xi1>
    %131 = vector.broadcast %130 : vector<8x1xi1> to vector<8x32xi1>
    %132 = arith.select %131, %106, %64 : vector<8x32xi1>, vector<8x32xf32>
    %133 = vector.shape_cast %126 : vector<8x1xi1> to vector<8x1xi1>
    %134 = vector.broadcast %133 : vector<8x1xi1> to vector<8x32xi1>
    %135 = arith.select %134, %124, %67 : vector<8x32xi1>, vector<8x32xf32>
    %136 = vector.shape_cast %126 : vector<8x1xi1> to vector<8x1xi1>
    %137 = vector.broadcast %136 : vector<8x1xi1> to vector<8x32xi1>
    %138 = arith.select %137, %122, %70 : vector<8x32xi1>, vector<8x32xf32>
    %cst_36 = arith.constant 0.000000e+00 : f32
    %139 = vector.shape_cast %125 : vector<8x1xi1> to vector<8x1xi1>
    %140 = vector.broadcast %139 : vector<8x1xi1> to vector<8x32xi1>
    %141 = vector.broadcast %cst_36 : f32 to vector<8x32xf32>
    %142 = arith.select %140, %108, %141 : vector<8x32xi1>, vector<8x32xf32>
    %c1 = arith.constant 1 : index
    %c0_37 = arith.constant 0 : index
    %c0_38 = arith.constant 0 : index
    %143 = vector.load %arg6[%c1, %c0_37, %c0_38] : memref<8x8x32xf32, #tpu.memory_space<vmem>>, vector<1x8x32xf32>
    %144 = vector.shape_cast %143 : vector<1x8x32xf32> to vector<8x32xf32>
    %145 = vector.shape_cast %142 : vector<8x32xf32> to vector<1x8x32xf32>
    tpu.vector_store %arg6[%c1, %c0_37, %c0_38], %145 {strides = array<i32>} : memref<8x8x32xf32, #tpu.memory_space<vmem>>, vector<1x8x32xf32>,
    %cst_39 = arith.constant 0.000000e+00 : f32
    %146 = vector.shape_cast %126 : vector<8x1xi1> to vector<8x1xi1>
    %147 = vector.broadcast %146 : vector<8x1xi1> to vector<8x32xi1>
    %148 = vector.broadcast %cst_39 : f32 to vector<8x32xf32>
    %149 = arith.select %147, %124, %148 : vector<8x32xi1>, vector<8x32xf32>
    %c6 = arith.constant 6 : index
    %c0_40 = arith.constant 0 : index
    %c0_41 = arith.constant 0 : index
    %150 = vector.load %arg7[%c6, %c0_40, %c0_41] : memref<8x8x32xf32, #tpu.memory_space<vmem>>, vector<1x8x32xf32>
    %151 = vector.shape_cast %150 : vector<1x8x32xf32> to vector<8x32xf32>
    %152 = vector.shape_cast %149 : vector<8x32xf32> to vector<1x8x32xf32>
    tpu.vector_store %arg7[%c6, %c0_40, %c0_41], %152 {strides = array<i32>} : memref<8x8x32xf32, #tpu.memory_space<vmem>>, vector<1x8x32xf32>,
    %c16 = arith.constant 16 : index
    %c0_42 = arith.constant 0 : index
    %153 = vector.load %arg8[%c16, %c0_42] : memref<64x256xf32, #tpu.memory_space<vmem>>, vector<8x128xf32>
    %154 = arith.truncf %129 : vector<8x32xf32> to vector<8x32xbf16>
    %cst_43 = arith.constant dense<0.000000e+00> : vector<8x128xf32>
    %155 = tpu.matmul %154, %7, %cst_43 {dimension_numbers = #tpu.dot_dimension_numbers<[1], [0], [0], [1], [0, 0, 1, 1], [], []>} : vector<8x32xbf16>, vector<32x128xbf16>, vector<8x128xf32> -> vector<8x128xf32>
    %156 = arith.addf %153, %155 : vector<8x128xf32>
    %c40 = arith.constant 40 : index
    %c128_44 = arith.constant 128 : index
    %157 = vector.load %arg8[%c40, %c128_44] : memref<64x256xf32, #tpu.memory_space<vmem>>, vector<8x128xf32>
    %158 = arith.truncf %135 : vector<8x32xf32> to vector<8x32xbf16>
    %cst_45 = arith.constant dense<0.000000e+00> : vector<8x128xf32>
    %159 = tpu.matmul %158, %8, %cst_45 {dimension_numbers = #tpu.dot_dimension_numbers<[1], [0], [0], [1], [0, 0, 1, 1], [], []>} : vector<8x32xbf16>, vector<32x128xbf16>, vector<8x128xf32> -> vector<8x128xf32>
    %160 = arith.addf %157, %159 : vector<8x128xf32>
    %161 = vector.extract_strided_slice %156 {offsets = [0, 0], sizes = [8, 96], strides = [1, 1]} : vector<8x128xf32> to vector<8x96xf32>
    %162 = arith.negf %161 : vector<8x96xf32>
    %163 = math.exp %162 : vector<8x96xf32>
    %cst_46 = arith.constant 1.000000e+00 : f32
    %164 = vector.broadcast %cst_46 : f32 to vector<8x96xf32>
    %165 = arith.addf %164, %163 : vector<8x96xf32>
    %166 = arith.divf %164, %165 : vector<8x96xf32>
    %167 = vector.extract_strided_slice %156 {offsets = [0, 96], sizes = [8, 32], strides = [1, 1]} : vector<8x128xf32> to vector<8x32xf32>
    %168 = math.tanh %167 : vector<8x32xf32>
    %169 = vector.extract_strided_slice %166 {offsets = [0, 0], sizes = [8, 32], strides = [1, 1]} : vector<8x96xf32> to vector<8x32xf32>
    %170 = vector.extract_strided_slice %166 {offsets = [0, 32], sizes = [8, 32], strides = [1, 1]} : vector<8x96xf32> to vector<8x32xf32>
    %171 = vector.extract_strided_slice %166 {offsets = [0, 64], sizes = [8, 32], strides = [1, 1]} : vector<8x96xf32> to vector<8x32xf32>
    %172 = arith.mulf %170, %132 : vector<8x32xf32>
    %173 = arith.mulf %169, %168 : vector<8x32xf32>
    %174 = arith.addf %172, %173 : vector<8x32xf32>
    %175 = math.tanh %174 : vector<8x32xf32>
    %176 = arith.mulf %171, %175 : vector<8x32xf32>
    %177 = vector.extract_strided_slice %160 {offsets = [0, 0], sizes = [8, 96], strides = [1, 1]} : vector<8x128xf32> to vector<8x96xf32>
    %178 = arith.negf %177 : vector<8x96xf32>
    %179 = math.exp %178 : vector<8x96xf32>
    %cst_47 = arith.constant 1.000000e+00 : f32
    %180 = vector.broadcast %cst_47 : f32 to vector<8x96xf32>
    %181 = arith.addf %180, %179 : vector<8x96xf32>
    %182 = arith.divf %180, %181 : vector<8x96xf32>
    %183 = vector.extract_strided_slice %160 {offsets = [0, 96], sizes = [8, 32], strides = [1, 1]} : vector<8x128xf32> to vector<8x32xf32>
    %184 = math.tanh %183 : vector<8x32xf32>
    %185 = vector.extract_strided_slice %182 {offsets = [0, 0], sizes = [8, 32], strides = [1, 1]} : vector<8x96xf32> to vector<8x32xf32>
    %186 = vector.extract_strided_slice %182 {offsets = [0, 32], sizes = [8, 32], strides = [1, 1]} : vector<8x96xf32> to vector<8x32xf32>
    %187 = vector.extract_strided_slice %182 {offsets = [0, 64], sizes = [8, 32], strides = [1, 1]} : vector<8x96xf32> to vector<8x32xf32>
    %188 = arith.mulf %186, %138 : vector<8x32xf32>
    %189 = arith.mulf %185, %184 : vector<8x32xf32>
    %190 = arith.addf %188, %189 : vector<8x32xf32>
    %191 = math.tanh %190 : vector<8x32xf32>
    %192 = arith.mulf %187, %191 : vector<8x32xf32>
    %193 = vector.extract_strided_slice %12 {offsets = [0, 2], sizes = [8, 1], strides = [1, 1]} : vector<8x8xi1> to vector<8x1xi1>
    %194 = vector.extract_strided_slice %12 {offsets = [0, 5], sizes = [8, 1], strides = [1, 1]} : vector<8x8xi1> to vector<8x1xi1>
    %195 = vector.shape_cast %193 : vector<8x1xi1> to vector<8x1xi1>
    %196 = vector.broadcast %195 : vector<8x1xi1> to vector<8x32xi1>
    %197 = arith.select %196, %176, %129 : vector<8x32xi1>, vector<8x32xf32>
    %198 = vector.shape_cast %193 : vector<8x1xi1> to vector<8x1xi1>
    %199 = vector.broadcast %198 : vector<8x1xi1> to vector<8x32xi1>
    %200 = arith.select %199, %174, %132 : vector<8x32xi1>, vector<8x32xf32>
    %201 = vector.shape_cast %194 : vector<8x1xi1> to vector<8x1xi1>
    %202 = vector.broadcast %201 : vector<8x1xi1> to vector<8x32xi1>
    %203 = arith.select %202, %192, %135 : vector<8x32xi1>, vector<8x32xf32>
    %204 = vector.shape_cast %194 : vector<8x1xi1> to vector<8x1xi1>
    %205 = vector.broadcast %204 : vector<8x1xi1> to vector<8x32xi1>
    %206 = arith.select %205, %190, %138 : vector<8x32xi1>, vector<8x32xf32>
    %cst_48 = arith.constant 0.000000e+00 : f32
    %207 = vector.shape_cast %193 : vector<8x1xi1> to vector<8x1xi1>
    %208 = vector.broadcast %207 : vector<8x1xi1> to vector<8x32xi1>
    %209 = vector.broadcast %cst_48 : f32 to vector<8x32xf32>
    %210 = arith.select %208, %176, %209 : vector<8x32xi1>, vector<8x32xf32>
    %c2 = arith.constant 2 : index
    %c0_49 = arith.constant 0 : index
    %c0_50 = arith.constant 0 : index
    %211 = vector.load %arg6[%c2, %c0_49, %c0_50] : memref<8x8x32xf32, #tpu.memory_space<vmem>>, vector<1x8x32xf32>
    %212 = vector.shape_cast %211 : vector<1x8x32xf32> to vector<8x32xf32>
    %213 = vector.shape_cast %210 : vector<8x32xf32> to vector<1x8x32xf32>
    tpu.vector_store %arg6[%c2, %c0_49, %c0_50], %213 {strides = array<i32>} : memref<8x8x32xf32, #tpu.memory_space<vmem>>, vector<1x8x32xf32>,
    %cst_51 = arith.constant 0.000000e+00 : f32
    %214 = vector.shape_cast %194 : vector<8x1xi1> to vector<8x1xi1>
    %215 = vector.broadcast %214 : vector<8x1xi1> to vector<8x32xi1>
    %216 = vector.broadcast %cst_51 : f32 to vector<8x32xf32>
    %217 = arith.select %215, %192, %216 : vector<8x32xi1>, vector<8x32xf32>
    %c5 = arith.constant 5 : index
    %c0_52 = arith.constant 0 : index
    %c0_53 = arith.constant 0 : index
    %218 = vector.load %arg7[%c5, %c0_52, %c0_53] : memref<8x8x32xf32, #tpu.memory_space<vmem>>, vector<1x8x32xf32>
    %219 = vector.shape_cast %218 : vector<1x8x32xf32> to vector<8x32xf32>
    %220 = vector.shape_cast %217 : vector<8x32xf32> to vector<1x8x32xf32>
    tpu.vector_store %arg7[%c5, %c0_52, %c0_53], %220 {strides = array<i32>} : memref<8x8x32xf32, #tpu.memory_space<vmem>>, vector<1x8x32xf32>,
    %c24 = arith.constant 24 : index
    %c0_54 = arith.constant 0 : index
    %221 = vector.load %arg8[%c24, %c0_54] : memref<64x256xf32, #tpu.memory_space<vmem>>, vector<8x128xf32>
    %222 = arith.truncf %197 : vector<8x32xf32> to vector<8x32xbf16>
    %cst_55 = arith.constant dense<0.000000e+00> : vector<8x128xf32>
    %223 = tpu.matmul %222, %7, %cst_55 {dimension_numbers = #tpu.dot_dimension_numbers<[1], [0], [0], [1], [0, 0, 1, 1], [], []>} : vector<8x32xbf16>, vector<32x128xbf16>, vector<8x128xf32> -> vector<8x128xf32>
    %224 = arith.addf %221, %223 : vector<8x128xf32>
    %c32 = arith.constant 32 : index
    %c128_56 = arith.constant 128 : index
    %225 = vector.load %arg8[%c32, %c128_56] : memref<64x256xf32, #tpu.memory_space<vmem>>, vector<8x128xf32>
    %226 = arith.truncf %203 : vector<8x32xf32> to vector<8x32xbf16>
    %cst_57 = arith.constant dense<0.000000e+00> : vector<8x128xf32>
    %227 = tpu.matmul %226, %8, %cst_57 {dimension_numbers = #tpu.dot_dimension_numbers<[1], [0], [0], [1], [0, 0, 1, 1], [], []>} : vector<8x32xbf16>, vector<32x128xbf16>, vector<8x128xf32> -> vector<8x128xf32>
    %228 = arith.addf %225, %227 : vector<8x128xf32>
    %229 = vector.extract_strided_slice %224 {offsets = [0, 0], sizes = [8, 96], strides = [1, 1]} : vector<8x128xf32> to vector<8x96xf32>
    %230 = arith.negf %229 : vector<8x96xf32>
    %231 = math.exp %230 : vector<8x96xf32>
    %cst_58 = arith.constant 1.000000e+00 : f32
    %232 = vector.broadcast %cst_58 : f32 to vector<8x96xf32>
    %233 = arith.addf %232, %231 : vector<8x96xf32>
    %234 = arith.divf %232, %233 : vector<8x96xf32>
    %235 = vector.extract_strided_slice %224 {offsets = [0, 96], sizes = [8, 32], strides = [1, 1]} : vector<8x128xf32> to vector<8x32xf32>
    %236 = math.tanh %235 : vector<8x32xf32>
    %237 = vector.extract_strided_slice %234 {offsets = [0, 0], sizes = [8, 32], strides = [1, 1]} : vector<8x96xf32> to vector<8x32xf32>
    %238 = vector.extract_strided_slice %234 {offsets = [0, 32], sizes = [8, 32], strides = [1, 1]} : vector<8x96xf32> to vector<8x32xf32>
    %239 = vector.extract_strided_slice %234 {offsets = [0, 64], sizes = [8, 32], strides = [1, 1]} : vector<8x96xf32> to vector<8x32xf32>
    %240 = arith.mulf %238, %200 : vector<8x32xf32>
    %241 = arith.mulf %237, %236 : vector<8x32xf32>
    %242 = arith.addf %240, %241 : vector<8x32xf32>
    %243 = math.tanh %242 : vector<8x32xf32>
    %244 = arith.mulf %239, %243 : vector<8x32xf32>
    %245 = vector.extract_strided_slice %228 {offsets = [0, 0], sizes = [8, 96], strides = [1, 1]} : vector<8x128xf32> to vector<8x96xf32>
    %246 = arith.negf %245 : vector<8x96xf32>
    %247 = math.exp %246 : vector<8x96xf32>
    %cst_59 = arith.constant 1.000000e+00 : f32
    %248 = vector.broadcast %cst_59 : f32 to vector<8x96xf32>
    %249 = arith.addf %248, %247 : vector<8x96xf32>
    %250 = arith.divf %248, %249 : vector<8x96xf32>
    %251 = vector.extract_strided_slice %228 {offsets = [0, 96], sizes = [8, 32], strides = [1, 1]} : vector<8x128xf32> to vector<8x32xf32>
    %252 = math.tanh %251 : vector<8x32xf32>
    %253 = vector.extract_strided_slice %250 {offsets = [0, 0], sizes = [8, 32], strides = [1, 1]} : vector<8x96xf32> to vector<8x32xf32>
    %254 = vector.extract_strided_slice %250 {offsets = [0, 32], sizes = [8, 32], strides = [1, 1]} : vector<8x96xf32> to vector<8x32xf32>
    %255 = vector.extract_strided_slice %250 {offsets = [0, 64], sizes = [8, 32], strides = [1, 1]} : vector<8x96xf32> to vector<8x32xf32>
    %256 = arith.mulf %254, %206 : vector<8x32xf32>
    %257 = arith.mulf %253, %252 : vector<8x32xf32>
    %258 = arith.addf %256, %257 : vector<8x32xf32>
    %259 = math.tanh %258 : vector<8x32xf32>
    %260 = arith.mulf %255, %259 : vector<8x32xf32>
    %261 = vector.extract_strided_slice %12 {offsets = [0, 3], sizes = [8, 1], strides = [1, 1]} : vector<8x8xi1> to vector<8x1xi1>
    %262 = vector.extract_strided_slice %12 {offsets = [0, 4], sizes = [8, 1], strides = [1, 1]} : vector<8x8xi1> to vector<8x1xi1>
    %263 = vector.shape_cast %261 : vector<8x1xi1> to vector<8x1xi1>
    %264 = vector.broadcast %263 : vector<8x1xi1> to vector<8x32xi1>
    %265 = arith.select %264, %244, %197 : vector<8x32xi1>, vector<8x32xf32>
    %266 = vector.shape_cast %261 : vector<8x1xi1> to vector<8x1xi1>
    %267 = vector.broadcast %266 : vector<8x1xi1> to vector<8x32xi1>
    %268 = arith.select %267, %242, %200 : vector<8x32xi1>, vector<8x32xf32>
    %269 = vector.shape_cast %262 : vector<8x1xi1> to vector<8x1xi1>
    %270 = vector.broadcast %269 : vector<8x1xi1> to vector<8x32xi1>
    %271 = arith.select %270, %260, %203 : vector<8x32xi1>, vector<8x32xf32>
    %272 = vector.shape_cast %262 : vector<8x1xi1> to vector<8x1xi1>
    %273 = vector.broadcast %272 : vector<8x1xi1> to vector<8x32xi1>
    %274 = arith.select %273, %258, %206 : vector<8x32xi1>, vector<8x32xf32>
    %cst_60 = arith.constant 0.000000e+00 : f32
    %275 = vector.shape_cast %261 : vector<8x1xi1> to vector<8x1xi1>
    %276 = vector.broadcast %275 : vector<8x1xi1> to vector<8x32xi1>
    %277 = vector.broadcast %cst_60 : f32 to vector<8x32xf32>
    %278 = arith.select %276, %244, %277 : vector<8x32xi1>, vector<8x32xf32>
    %c3 = arith.constant 3 : index
    %c0_61 = arith.constant 0 : index
    %c0_62 = arith.constant 0 : index
    %279 = vector.load %arg6[%c3, %c0_61, %c0_62] : memref<8x8x32xf32, #tpu.memory_space<vmem>>, vector<1x8x32xf32>
    %280 = vector.shape_cast %279 : vector<1x8x32xf32> to vector<8x32xf32>
    %281 = vector.shape_cast %278 : vector<8x32xf32> to vector<1x8x32xf32>
    tpu.vector_store %arg6[%c3, %c0_61, %c0_62], %281 {strides = array<i32>} : memref<8x8x32xf32, #tpu.memory_space<vmem>>, vector<1x8x32xf32>,
    %cst_63 = arith.constant 0.000000e+00 : f32
    %282 = vector.shape_cast %262 : vector<8x1xi1> to vector<8x1xi1>
    %283 = vector.broadcast %282 : vector<8x1xi1> to vector<8x32xi1>
    %284 = vector.broadcast %cst_63 : f32 to vector<8x32xf32>
    %285 = arith.select %283, %260, %284 : vector<8x32xi1>, vector<8x32xf32>
    %c4 = arith.constant 4 : index
    %c0_64 = arith.constant 0 : index
    %c0_65 = arith.constant 0 : index
    %286 = vector.load %arg7[%c4, %c0_64, %c0_65] : memref<8x8x32xf32, #tpu.memory_space<vmem>>, vector<1x8x32xf32>
    %287 = vector.shape_cast %286 : vector<1x8x32xf32> to vector<8x32xf32>
    %288 = vector.shape_cast %285 : vector<8x32xf32> to vector<1x8x32xf32>
    tpu.vector_store %arg7[%c4, %c0_64, %c0_65], %288 {strides = array<i32>} : memref<8x8x32xf32, #tpu.memory_space<vmem>>, vector<1x8x32xf32>,
    %c32_66 = arith.constant 32 : index
    %c0_67 = arith.constant 0 : index
    %289 = vector.load %arg8[%c32_66, %c0_67] : memref<64x256xf32, #tpu.memory_space<vmem>>, vector<8x128xf32>
    %290 = arith.truncf %265 : vector<8x32xf32> to vector<8x32xbf16>
    %cst_68 = arith.constant dense<0.000000e+00> : vector<8x128xf32>
    %291 = tpu.matmul %290, %7, %cst_68 {dimension_numbers = #tpu.dot_dimension_numbers<[1], [0], [0], [1], [0, 0, 1, 1], [], []>} : vector<8x32xbf16>, vector<32x128xbf16>, vector<8x128xf32> -> vector<8x128xf32>
    %292 = arith.addf %289, %291 : vector<8x128xf32>
    %c24_69 = arith.constant 24 : index
    %c128_70 = arith.constant 128 : index
    %293 = vector.load %arg8[%c24_69, %c128_70] : memref<64x256xf32, #tpu.memory_space<vmem>>, vector<8x128xf32>
    %294 = arith.truncf %271 : vector<8x32xf32> to vector<8x32xbf16>
    %cst_71 = arith.constant dense<0.000000e+00> : vector<8x128xf32>
    %295 = tpu.matmul %294, %8, %cst_71 {dimension_numbers = #tpu.dot_dimension_numbers<[1], [0], [0], [1], [0, 0, 1, 1], [], []>} : vector<8x32xbf16>, vector<32x128xbf16>, vector<8x128xf32> -> vector<8x128xf32>
    %296 = arith.addf %293, %295 : vector<8x128xf32>
    %297 = vector.extract_strided_slice %292 {offsets = [0, 0], sizes = [8, 96], strides = [1, 1]} : vector<8x128xf32> to vector<8x96xf32>
    %298 = arith.negf %297 : vector<8x96xf32>
    %299 = math.exp %298 : vector<8x96xf32>
    %cst_72 = arith.constant 1.000000e+00 : f32
    %300 = vector.broadcast %cst_72 : f32 to vector<8x96xf32>
    %301 = arith.addf %300, %299 : vector<8x96xf32>
    %302 = arith.divf %300, %301 : vector<8x96xf32>
    %303 = vector.extract_strided_slice %292 {offsets = [0, 96], sizes = [8, 32], strides = [1, 1]} : vector<8x128xf32> to vector<8x32xf32>
    %304 = math.tanh %303 : vector<8x32xf32>
    %305 = vector.extract_strided_slice %302 {offsets = [0, 0], sizes = [8, 32], strides = [1, 1]} : vector<8x96xf32> to vector<8x32xf32>
    %306 = vector.extract_strided_slice %302 {offsets = [0, 32], sizes = [8, 32], strides = [1, 1]} : vector<8x96xf32> to vector<8x32xf32>
    %307 = vector.extract_strided_slice %302 {offsets = [0, 64], sizes = [8, 32], strides = [1, 1]} : vector<8x96xf32> to vector<8x32xf32>
    %308 = arith.mulf %306, %268 : vector<8x32xf32>
    %309 = arith.mulf %305, %304 : vector<8x32xf32>
    %310 = arith.addf %308, %309 : vector<8x32xf32>
    %311 = math.tanh %310 : vector<8x32xf32>
    %312 = arith.mulf %307, %311 : vector<8x32xf32>
    %313 = vector.extract_strided_slice %296 {offsets = [0, 0], sizes = [8, 96], strides = [1, 1]} : vector<8x128xf32> to vector<8x96xf32>
    %314 = arith.negf %313 : vector<8x96xf32>
    %315 = math.exp %314 : vector<8x96xf32>
    %cst_73 = arith.constant 1.000000e+00 : f32
    %316 = vector.broadcast %cst_73 : f32 to vector<8x96xf32>
    %317 = arith.addf %316, %315 : vector<8x96xf32>
    %318 = arith.divf %316, %317 : vector<8x96xf32>
    %319 = vector.extract_strided_slice %296 {offsets = [0, 96], sizes = [8, 32], strides = [1, 1]} : vector<8x128xf32> to vector<8x32xf32>
    %320 = math.tanh %319 : vector<8x32xf32>
    %321 = vector.extract_strided_slice %318 {offsets = [0, 0], sizes = [8, 32], strides = [1, 1]} : vector<8x96xf32> to vector<8x32xf32>
    %322 = vector.extract_strided_slice %318 {offsets = [0, 32], sizes = [8, 32], strides = [1, 1]} : vector<8x96xf32> to vector<8x32xf32>
    %323 = vector.extract_strided_slice %318 {offsets = [0, 64], sizes = [8, 32], strides = [1, 1]} : vector<8x96xf32> to vector<8x32xf32>
    %324 = arith.mulf %322, %274 : vector<8x32xf32>
    %325 = arith.mulf %321, %320 : vector<8x32xf32>
    %326 = arith.addf %324, %325 : vector<8x32xf32>
    %327 = math.tanh %326 : vector<8x32xf32>
    %328 = arith.mulf %323, %327 : vector<8x32xf32>
    %329 = vector.extract_strided_slice %12 {offsets = [0, 4], sizes = [8, 1], strides = [1, 1]} : vector<8x8xi1> to vector<8x1xi1>
    %330 = vector.extract_strided_slice %12 {offsets = [0, 3], sizes = [8, 1], strides = [1, 1]} : vector<8x8xi1> to vector<8x1xi1>
    %331 = vector.shape_cast %329 : vector<8x1xi1> to vector<8x1xi1>
    %332 = vector.broadcast %331 : vector<8x1xi1> to vector<8x32xi1>
    %333 = arith.select %332, %312, %265 : vector<8x32xi1>, vector<8x32xf32>
    %334 = vector.shape_cast %329 : vector<8x1xi1> to vector<8x1xi1>
    %335 = vector.broadcast %334 : vector<8x1xi1> to vector<8x32xi1>
    %336 = arith.select %335, %310, %268 : vector<8x32xi1>, vector<8x32xf32>
    %337 = vector.shape_cast %330 : vector<8x1xi1> to vector<8x1xi1>
    %338 = vector.broadcast %337 : vector<8x1xi1> to vector<8x32xi1>
    %339 = arith.select %338, %328, %271 : vector<8x32xi1>, vector<8x32xf32>
    %340 = vector.shape_cast %330 : vector<8x1xi1> to vector<8x1xi1>
    %341 = vector.broadcast %340 : vector<8x1xi1> to vector<8x32xi1>
    %342 = arith.select %341, %326, %274 : vector<8x32xi1>, vector<8x32xf32>
    %cst_74 = arith.constant 0.000000e+00 : f32
    %343 = vector.shape_cast %329 : vector<8x1xi1> to vector<8x1xi1>
    %344 = vector.broadcast %343 : vector<8x1xi1> to vector<8x32xi1>
    %345 = vector.broadcast %cst_74 : f32 to vector<8x32xf32>
    %346 = arith.select %344, %312, %345 : vector<8x32xi1>, vector<8x32xf32>
    %c4_75 = arith.constant 4 : index
    %c0_76 = arith.constant 0 : index
    %c0_77 = arith.constant 0 : index
    %347 = vector.load %arg6[%c4_75, %c0_76, %c0_77] : memref<8x8x32xf32, #tpu.memory_space<vmem>>, vector<1x8x32xf32>
    %348 = vector.shape_cast %347 : vector<1x8x32xf32> to vector<8x32xf32>
    %349 = vector.shape_cast %346 : vector<8x32xf32> to vector<1x8x32xf32>
    tpu.vector_store %arg6[%c4_75, %c0_76, %c0_77], %349 {strides = array<i32>} : memref<8x8x32xf32, #tpu.memory_space<vmem>>, vector<1x8x32xf32>,
    %cst_78 = arith.constant 0.000000e+00 : f32
    %350 = vector.shape_cast %330 : vector<8x1xi1> to vector<8x1xi1>
    %351 = vector.broadcast %350 : vector<8x1xi1> to vector<8x32xi1>
    %352 = vector.broadcast %cst_78 : f32 to vector<8x32xf32>
    %353 = arith.select %351, %328, %352 : vector<8x32xi1>, vector<8x32xf32>
    %c3_79 = arith.constant 3 : index
    %c0_80 = arith.constant 0 : index
    %c0_81 = arith.constant 0 : index
    %354 = vector.load %arg7[%c3_79, %c0_80, %c0_81] : memref<8x8x32xf32, #tpu.memory_space<vmem>>, vector<1x8x32xf32>
    %355 = vector.shape_cast %354 : vector<1x8x32xf32> to vector<8x32xf32>
    %356 = vector.shape_cast %353 : vector<8x32xf32> to vector<1x8x32xf32>
    tpu.vector_store %arg7[%c3_79, %c0_80, %c0_81], %356 {strides = array<i32>} : memref<8x8x32xf32, #tpu.memory_space<vmem>>, vector<1x8x32xf32>,
    %c40_82 = arith.constant 40 : index
    %c0_83 = arith.constant 0 : index
    %357 = vector.load %arg8[%c40_82, %c0_83] : memref<64x256xf32, #tpu.memory_space<vmem>>, vector<8x128xf32>
    %358 = arith.truncf %333 : vector<8x32xf32> to vector<8x32xbf16>
    %cst_84 = arith.constant dense<0.000000e+00> : vector<8x128xf32>
    %359 = tpu.matmul %358, %7, %cst_84 {dimension_numbers = #tpu.dot_dimension_numbers<[1], [0], [0], [1], [0, 0, 1, 1], [], []>} : vector<8x32xbf16>, vector<32x128xbf16>, vector<8x128xf32> -> vector<8x128xf32>
    %360 = arith.addf %357, %359 : vector<8x128xf32>
    %c16_85 = arith.constant 16 : index
    %c128_86 = arith.constant 128 : index
    %361 = vector.load %arg8[%c16_85, %c128_86] : memref<64x256xf32, #tpu.memory_space<vmem>>, vector<8x128xf32>
    %362 = arith.truncf %339 : vector<8x32xf32> to vector<8x32xbf16>
    %cst_87 = arith.constant dense<0.000000e+00> : vector<8x128xf32>
    %363 = tpu.matmul %362, %8, %cst_87 {dimension_numbers = #tpu.dot_dimension_numbers<[1], [0], [0], [1], [0, 0, 1, 1], [], []>} : vector<8x32xbf16>, vector<32x128xbf16>, vector<8x128xf32> -> vector<8x128xf32>
    %364 = arith.addf %361, %363 : vector<8x128xf32>
    %365 = vector.extract_strided_slice %360 {offsets = [0, 0], sizes = [8, 96], strides = [1, 1]} : vector<8x128xf32> to vector<8x96xf32>
    %366 = arith.negf %365 : vector<8x96xf32>
    %367 = math.exp %366 : vector<8x96xf32>
    %cst_88 = arith.constant 1.000000e+00 : f32
    %368 = vector.broadcast %cst_88 : f32 to vector<8x96xf32>
    %369 = arith.addf %368, %367 : vector<8x96xf32>
    %370 = arith.divf %368, %369 : vector<8x96xf32>
    %371 = vector.extract_strided_slice %360 {offsets = [0, 96], sizes = [8, 32], strides = [1, 1]} : vector<8x128xf32> to vector<8x32xf32>
    %372 = math.tanh %371 : vector<8x32xf32>
    %373 = vector.extract_strided_slice %370 {offsets = [0, 0], sizes = [8, 32], strides = [1, 1]} : vector<8x96xf32> to vector<8x32xf32>
    %374 = vector.extract_strided_slice %370 {offsets = [0, 32], sizes = [8, 32], strides = [1, 1]} : vector<8x96xf32> to vector<8x32xf32>
    %375 = vector.extract_strided_slice %370 {offsets = [0, 64], sizes = [8, 32], strides = [1, 1]} : vector<8x96xf32> to vector<8x32xf32>
    %376 = arith.mulf %374, %336 : vector<8x32xf32>
    %377 = arith.mulf %373, %372 : vector<8x32xf32>
    %378 = arith.addf %376, %377 : vector<8x32xf32>
    %379 = math.tanh %378 : vector<8x32xf32>
    %380 = arith.mulf %375, %379 : vector<8x32xf32>
    %381 = vector.extract_strided_slice %364 {offsets = [0, 0], sizes = [8, 96], strides = [1, 1]} : vector<8x128xf32> to vector<8x96xf32>
    %382 = arith.negf %381 : vector<8x96xf32>
    %383 = math.exp %382 : vector<8x96xf32>
    %cst_89 = arith.constant 1.000000e+00 : f32
    %384 = vector.broadcast %cst_89 : f32 to vector<8x96xf32>
    %385 = arith.addf %384, %383 : vector<8x96xf32>
    %386 = arith.divf %384, %385 : vector<8x96xf32>
    %387 = vector.extract_strided_slice %364 {offsets = [0, 96], sizes = [8, 32], strides = [1, 1]} : vector<8x128xf32> to vector<8x32xf32>
    %388 = math.tanh %387 : vector<8x32xf32>
    %389 = vector.extract_strided_slice %386 {offsets = [0, 0], sizes = [8, 32], strides = [1, 1]} : vector<8x96xf32> to vector<8x32xf32>
    %390 = vector.extract_strided_slice %386 {offsets = [0, 32], sizes = [8, 32], strides = [1, 1]} : vector<8x96xf32> to vector<8x32xf32>
    %391 = vector.extract_strided_slice %386 {offsets = [0, 64], sizes = [8, 32], strides = [1, 1]} : vector<8x96xf32> to vector<8x32xf32>
    %392 = arith.mulf %390, %342 : vector<8x32xf32>
    %393 = arith.mulf %389, %388 : vector<8x32xf32>
    %394 = arith.addf %392, %393 : vector<8x32xf32>
    %395 = math.tanh %394 : vector<8x32xf32>
    %396 = arith.mulf %391, %395 : vector<8x32xf32>
    %397 = vector.extract_strided_slice %12 {offsets = [0, 5], sizes = [8, 1], strides = [1, 1]} : vector<8x8xi1> to vector<8x1xi1>
    %398 = vector.extract_strided_slice %12 {offsets = [0, 2], sizes = [8, 1], strides = [1, 1]} : vector<8x8xi1> to vector<8x1xi1>
    %399 = vector.shape_cast %397 : vector<8x1xi1> to vector<8x1xi1>
    %400 = vector.broadcast %399 : vector<8x1xi1> to vector<8x32xi1>
    %401 = arith.select %400, %380, %333 : vector<8x32xi1>, vector<8x32xf32>
    %402 = vector.shape_cast %397 : vector<8x1xi1> to vector<8x1xi1>
    %403 = vector.broadcast %402 : vector<8x1xi1> to vector<8x32xi1>
    %404 = arith.select %403, %378, %336 : vector<8x32xi1>, vector<8x32xf32>
    %405 = vector.shape_cast %398 : vector<8x1xi1> to vector<8x1xi1>
    %406 = vector.broadcast %405 : vector<8x1xi1> to vector<8x32xi1>
    %407 = arith.select %406, %396, %339 : vector<8x32xi1>, vector<8x32xf32>
    %408 = vector.shape_cast %398 : vector<8x1xi1> to vector<8x1xi1>
    %409 = vector.broadcast %408 : vector<8x1xi1> to vector<8x32xi1>
    %410 = arith.select %409, %394, %342 : vector<8x32xi1>, vector<8x32xf32>
    %cst_90 = arith.constant 0.000000e+00 : f32
    %411 = vector.shape_cast %397 : vector<8x1xi1> to vector<8x1xi1>
    %412 = vector.broadcast %411 : vector<8x1xi1> to vector<8x32xi1>
    %413 = vector.broadcast %cst_90 : f32 to vector<8x32xf32>
    %414 = arith.select %412, %380, %413 : vector<8x32xi1>, vector<8x32xf32>
    %c5_91 = arith.constant 5 : index
    %c0_92 = arith.constant 0 : index
    %c0_93 = arith.constant 0 : index
    %415 = vector.load %arg6[%c5_91, %c0_92, %c0_93] : memref<8x8x32xf32, #tpu.memory_space<vmem>>, vector<1x8x32xf32>
    %416 = vector.shape_cast %415 : vector<1x8x32xf32> to vector<8x32xf32>
    %417 = vector.shape_cast %414 : vector<8x32xf32> to vector<1x8x32xf32>
    tpu.vector_store %arg6[%c5_91, %c0_92, %c0_93], %417 {strides = array<i32>} : memref<8x8x32xf32, #tpu.memory_space<vmem>>, vector<1x8x32xf32>,
    %cst_94 = arith.constant 0.000000e+00 : f32
    %418 = vector.shape_cast %398 : vector<8x1xi1> to vector<8x1xi1>
    %419 = vector.broadcast %418 : vector<8x1xi1> to vector<8x32xi1>
    %420 = vector.broadcast %cst_94 : f32 to vector<8x32xf32>
    %421 = arith.select %419, %396, %420 : vector<8x32xi1>, vector<8x32xf32>
    %c2_95 = arith.constant 2 : index
    %c0_96 = arith.constant 0 : index
    %c0_97 = arith.constant 0 : index
    %422 = vector.load %arg7[%c2_95, %c0_96, %c0_97] : memref<8x8x32xf32, #tpu.memory_space<vmem>>, vector<1x8x32xf32>
    %423 = vector.shape_cast %422 : vector<1x8x32xf32> to vector<8x32xf32>
    %424 = vector.shape_cast %421 : vector<8x32xf32> to vector<1x8x32xf32>
    tpu.vector_store %arg7[%c2_95, %c0_96, %c0_97], %424 {strides = array<i32>} : memref<8x8x32xf32, #tpu.memory_space<vmem>>, vector<1x8x32xf32>,
    %c48_98 = arith.constant 48 : index
    %c0_99 = arith.constant 0 : index
    %425 = vector.load %arg8[%c48_98, %c0_99] : memref<64x256xf32, #tpu.memory_space<vmem>>, vector<8x128xf32>
    %426 = arith.truncf %401 : vector<8x32xf32> to vector<8x32xbf16>
    %cst_100 = arith.constant dense<0.000000e+00> : vector<8x128xf32>
    %427 = tpu.matmul %426, %7, %cst_100 {dimension_numbers = #tpu.dot_dimension_numbers<[1], [0], [0], [1], [0, 0, 1, 1], [], []>} : vector<8x32xbf16>, vector<32x128xbf16>, vector<8x128xf32> -> vector<8x128xf32>
    %428 = arith.addf %425, %427 : vector<8x128xf32>
    %c8_101 = arith.constant 8 : index
    %c128_102 = arith.constant 128 : index
    %429 = vector.load %arg8[%c8_101, %c128_102] : memref<64x256xf32, #tpu.memory_space<vmem>>, vector<8x128xf32>
    %430 = arith.truncf %407 : vector<8x32xf32> to vector<8x32xbf16>
    %cst_103 = arith.constant dense<0.000000e+00> : vector<8x128xf32>
    %431 = tpu.matmul %430, %8, %cst_103 {dimension_numbers = #tpu.dot_dimension_numbers<[1], [0], [0], [1], [0, 0, 1, 1], [], []>} : vector<8x32xbf16>, vector<32x128xbf16>, vector<8x128xf32> -> vector<8x128xf32>
    %432 = arith.addf %429, %431 : vector<8x128xf32>
    %433 = vector.extract_strided_slice %428 {offsets = [0, 0], sizes = [8, 96], strides = [1, 1]} : vector<8x128xf32> to vector<8x96xf32>
    %434 = arith.negf %433 : vector<8x96xf32>
    %435 = math.exp %434 : vector<8x96xf32>
    %cst_104 = arith.constant 1.000000e+00 : f32
    %436 = vector.broadcast %cst_104 : f32 to vector<8x96xf32>
    %437 = arith.addf %436, %435 : vector<8x96xf32>
    %438 = arith.divf %436, %437 : vector<8x96xf32>
    %439 = vector.extract_strided_slice %428 {offsets = [0, 96], sizes = [8, 32], strides = [1, 1]} : vector<8x128xf32> to vector<8x32xf32>
    %440 = math.tanh %439 : vector<8x32xf32>
    %441 = vector.extract_strided_slice %438 {offsets = [0, 0], sizes = [8, 32], strides = [1, 1]} : vector<8x96xf32> to vector<8x32xf32>
    %442 = vector.extract_strided_slice %438 {offsets = [0, 32], sizes = [8, 32], strides = [1, 1]} : vector<8x96xf32> to vector<8x32xf32>
    %443 = vector.extract_strided_slice %438 {offsets = [0, 64], sizes = [8, 32], strides = [1, 1]} : vector<8x96xf32> to vector<8x32xf32>
    %444 = arith.mulf %442, %404 : vector<8x32xf32>
    %445 = arith.mulf %441, %440 : vector<8x32xf32>
    %446 = arith.addf %444, %445 : vector<8x32xf32>
    %447 = math.tanh %446 : vector<8x32xf32>
    %448 = arith.mulf %443, %447 : vector<8x32xf32>
    %449 = vector.extract_strided_slice %432 {offsets = [0, 0], sizes = [8, 96], strides = [1, 1]} : vector<8x128xf32> to vector<8x96xf32>
    %450 = arith.negf %449 : vector<8x96xf32>
    %451 = math.exp %450 : vector<8x96xf32>
    %cst_105 = arith.constant 1.000000e+00 : f32
    %452 = vector.broadcast %cst_105 : f32 to vector<8x96xf32>
    %453 = arith.addf %452, %451 : vector<8x96xf32>
    %454 = arith.divf %452, %453 : vector<8x96xf32>
    %455 = vector.extract_strided_slice %432 {offsets = [0, 96], sizes = [8, 32], strides = [1, 1]} : vector<8x128xf32> to vector<8x32xf32>
    %456 = math.tanh %455 : vector<8x32xf32>
    %457 = vector.extract_strided_slice %454 {offsets = [0, 0], sizes = [8, 32], strides = [1, 1]} : vector<8x96xf32> to vector<8x32xf32>
    %458 = vector.extract_strided_slice %454 {offsets = [0, 32], sizes = [8, 32], strides = [1, 1]} : vector<8x96xf32> to vector<8x32xf32>
    %459 = vector.extract_strided_slice %454 {offsets = [0, 64], sizes = [8, 32], strides = [1, 1]} : vector<8x96xf32> to vector<8x32xf32>
    %460 = arith.mulf %458, %410 : vector<8x32xf32>
    %461 = arith.mulf %457, %456 : vector<8x32xf32>
    %462 = arith.addf %460, %461 : vector<8x32xf32>
    %463 = math.tanh %462 : vector<8x32xf32>
    %464 = arith.mulf %459, %463 : vector<8x32xf32>
    %465 = vector.extract_strided_slice %12 {offsets = [0, 6], sizes = [8, 1], strides = [1, 1]} : vector<8x8xi1> to vector<8x1xi1>
    %466 = vector.extract_strided_slice %12 {offsets = [0, 1], sizes = [8, 1], strides = [1, 1]} : vector<8x8xi1> to vector<8x1xi1>
    %467 = vector.shape_cast %465 : vector<8x1xi1> to vector<8x1xi1>
    %468 = vector.broadcast %467 : vector<8x1xi1> to vector<8x32xi1>
    %469 = arith.select %468, %448, %401 : vector<8x32xi1>, vector<8x32xf32>
    %470 = vector.shape_cast %465 : vector<8x1xi1> to vector<8x1xi1>
    %471 = vector.broadcast %470 : vector<8x1xi1> to vector<8x32xi1>
    %472 = arith.select %471, %446, %404 : vector<8x32xi1>, vector<8x32xf32>
    %473 = vector.shape_cast %466 : vector<8x1xi1> to vector<8x1xi1>
    %474 = vector.broadcast %473 : vector<8x1xi1> to vector<8x32xi1>
    %475 = arith.select %474, %464, %407 : vector<8x32xi1>, vector<8x32xf32>
    %476 = vector.shape_cast %466 : vector<8x1xi1> to vector<8x1xi1>
    %477 = vector.broadcast %476 : vector<8x1xi1> to vector<8x32xi1>
    %478 = arith.select %477, %462, %410 : vector<8x32xi1>, vector<8x32xf32>
    %cst_106 = arith.constant 0.000000e+00 : f32
    %479 = vector.shape_cast %465 : vector<8x1xi1> to vector<8x1xi1>
    %480 = vector.broadcast %479 : vector<8x1xi1> to vector<8x32xi1>
    %481 = vector.broadcast %cst_106 : f32 to vector<8x32xf32>
    %482 = arith.select %480, %448, %481 : vector<8x32xi1>, vector<8x32xf32>
    %c6_107 = arith.constant 6 : index
    %c0_108 = arith.constant 0 : index
    %c0_109 = arith.constant 0 : index
    %483 = vector.load %arg6[%c6_107, %c0_108, %c0_109] : memref<8x8x32xf32, #tpu.memory_space<vmem>>, vector<1x8x32xf32>
    %484 = vector.shape_cast %483 : vector<1x8x32xf32> to vector<8x32xf32>
    %485 = vector.shape_cast %482 : vector<8x32xf32> to vector<1x8x32xf32>
    tpu.vector_store %arg6[%c6_107, %c0_108, %c0_109], %485 {strides = array<i32>} : memref<8x8x32xf32, #tpu.memory_space<vmem>>, vector<1x8x32xf32>,
    %cst_110 = arith.constant 0.000000e+00 : f32
    %486 = vector.shape_cast %466 : vector<8x1xi1> to vector<8x1xi1>
    %487 = vector.broadcast %486 : vector<8x1xi1> to vector<8x32xi1>
    %488 = vector.broadcast %cst_110 : f32 to vector<8x32xf32>
    %489 = arith.select %487, %464, %488 : vector<8x32xi1>, vector<8x32xf32>
    %c1_111 = arith.constant 1 : index
    %c0_112 = arith.constant 0 : index
    %c0_113 = arith.constant 0 : index
    %490 = vector.load %arg7[%c1_111, %c0_112, %c0_113] : memref<8x8x32xf32, #tpu.memory_space<vmem>>, vector<1x8x32xf32>
    %491 = vector.shape_cast %490 : vector<1x8x32xf32> to vector<8x32xf32>
    %492 = vector.shape_cast %489 : vector<8x32xf32> to vector<1x8x32xf32>
    tpu.vector_store %arg7[%c1_111, %c0_112, %c0_113], %492 {strides = array<i32>} : memref<8x8x32xf32, #tpu.memory_space<vmem>>, vector<1x8x32xf32>,
    %c56_114 = arith.constant 56 : index
    %c0_115 = arith.constant 0 : index
    %493 = vector.load %arg8[%c56_114, %c0_115] : memref<64x256xf32, #tpu.memory_space<vmem>>, vector<8x128xf32>
    %494 = arith.truncf %469 : vector<8x32xf32> to vector<8x32xbf16>
    %cst_116 = arith.constant dense<0.000000e+00> : vector<8x128xf32>
    %495 = tpu.matmul %494, %7, %cst_116 {dimension_numbers = #tpu.dot_dimension_numbers<[1], [0], [0], [1], [0, 0, 1, 1], [], []>} : vector<8x32xbf16>, vector<32x128xbf16>, vector<8x128xf32> -> vector<8x128xf32>
    %496 = arith.addf %493, %495 : vector<8x128xf32>
    %c0_117 = arith.constant 0 : index
    %c128_118 = arith.constant 128 : index
    %497 = vector.load %arg8[%c0_117, %c128_118] : memref<64x256xf32, #tpu.memory_space<vmem>>, vector<8x128xf32>
    %498 = arith.truncf %475 : vector<8x32xf32> to vector<8x32xbf16>
    %cst_119 = arith.constant dense<0.000000e+00> : vector<8x128xf32>
    %499 = tpu.matmul %498, %8, %cst_119 {dimension_numbers = #tpu.dot_dimension_numbers<[1], [0], [0], [1], [0, 0, 1, 1], [], []>} : vector<8x32xbf16>, vector<32x128xbf16>, vector<8x128xf32> -> vector<8x128xf32>
    %500 = arith.addf %497, %499 : vector<8x128xf32>
    %501 = vector.extract_strided_slice %496 {offsets = [0, 0], sizes = [8, 96], strides = [1, 1]} : vector<8x128xf32> to vector<8x96xf32>
    %502 = arith.negf %501 : vector<8x96xf32>
    %503 = math.exp %502 : vector<8x96xf32>
    %cst_120 = arith.constant 1.000000e+00 : f32
    %504 = vector.broadcast %cst_120 : f32 to vector<8x96xf32>
    %505 = arith.addf %504, %503 : vector<8x96xf32>
    %506 = arith.divf %504, %505 : vector<8x96xf32>
    %507 = vector.extract_strided_slice %496 {offsets = [0, 96], sizes = [8, 32], strides = [1, 1]} : vector<8x128xf32> to vector<8x32xf32>
    %508 = math.tanh %507 : vector<8x32xf32>
    %509 = vector.extract_strided_slice %506 {offsets = [0, 0], sizes = [8, 32], strides = [1, 1]} : vector<8x96xf32> to vector<8x32xf32>
    %510 = vector.extract_strided_slice %506 {offsets = [0, 32], sizes = [8, 32], strides = [1, 1]} : vector<8x96xf32> to vector<8x32xf32>
    %511 = vector.extract_strided_slice %506 {offsets = [0, 64], sizes = [8, 32], strides = [1, 1]} : vector<8x96xf32> to vector<8x32xf32>
    %512 = arith.mulf %510, %472 : vector<8x32xf32>
    %513 = arith.mulf %509, %508 : vector<8x32xf32>
    %514 = arith.addf %512, %513 : vector<8x32xf32>
    %515 = math.tanh %514 : vector<8x32xf32>
    %516 = arith.mulf %511, %515 : vector<8x32xf32>
    %517 = vector.extract_strided_slice %500 {offsets = [0, 0], sizes = [8, 96], strides = [1, 1]} : vector<8x128xf32> to vector<8x96xf32>
    %518 = arith.negf %517 : vector<8x96xf32>
    %519 = math.exp %518 : vector<8x96xf32>
    %cst_121 = arith.constant 1.000000e+00 : f32
    %520 = vector.broadcast %cst_121 : f32 to vector<8x96xf32>
    %521 = arith.addf %520, %519 : vector<8x96xf32>
    %522 = arith.divf %520, %521 : vector<8x96xf32>
    %523 = vector.extract_strided_slice %500 {offsets = [0, 96], sizes = [8, 32], strides = [1, 1]} : vector<8x128xf32> to vector<8x32xf32>
    %524 = math.tanh %523 : vector<8x32xf32>
    %525 = vector.extract_strided_slice %522 {offsets = [0, 0], sizes = [8, 32], strides = [1, 1]} : vector<8x96xf32> to vector<8x32xf32>
    %526 = vector.extract_strided_slice %522 {offsets = [0, 32], sizes = [8, 32], strides = [1, 1]} : vector<8x96xf32> to vector<8x32xf32>
    %527 = vector.extract_strided_slice %522 {offsets = [0, 64], sizes = [8, 32], strides = [1, 1]} : vector<8x96xf32> to vector<8x32xf32>
    %528 = arith.mulf %526, %478 : vector<8x32xf32>
    %529 = arith.mulf %525, %524 : vector<8x32xf32>
    %530 = arith.addf %528, %529 : vector<8x32xf32>
    %531 = math.tanh %530 : vector<8x32xf32>
    %532 = arith.mulf %527, %531 : vector<8x32xf32>
    %533 = vector.extract_strided_slice %12 {offsets = [0, 7], sizes = [8, 1], strides = [1, 1]} : vector<8x8xi1> to vector<8x1xi1>
    %534 = vector.extract_strided_slice %12 {offsets = [0, 0], sizes = [8, 1], strides = [1, 1]} : vector<8x8xi1> to vector<8x1xi1>
    %cst_122 = arith.constant 0.000000e+00 : f32
    %535 = vector.shape_cast %533 : vector<8x1xi1> to vector<8x1xi1>
    %536 = vector.broadcast %535 : vector<8x1xi1> to vector<8x32xi1>
    %537 = vector.broadcast %cst_122 : f32 to vector<8x32xf32>
    %538 = arith.select %536, %516, %537 : vector<8x32xi1>, vector<8x32xf32>
    %c7_123 = arith.constant 7 : index
    %c0_124 = arith.constant 0 : index
    %c0_125 = arith.constant 0 : index
    %539 = vector.load %arg6[%c7_123, %c0_124, %c0_125] : memref<8x8x32xf32, #tpu.memory_space<vmem>>, vector<1x8x32xf32>
    %540 = vector.shape_cast %539 : vector<1x8x32xf32> to vector<8x32xf32>
    %541 = vector.shape_cast %538 : vector<8x32xf32> to vector<1x8x32xf32>
    tpu.vector_store %arg6[%c7_123, %c0_124, %c0_125], %541 {strides = array<i32>} : memref<8x8x32xf32, #tpu.memory_space<vmem>>, vector<1x8x32xf32>,
    %cst_126 = arith.constant 0.000000e+00 : f32
    %542 = vector.shape_cast %534 : vector<8x1xi1> to vector<8x1xi1>
    %543 = vector.broadcast %542 : vector<8x1xi1> to vector<8x32xi1>
    %544 = vector.broadcast %cst_126 : f32 to vector<8x32xf32>
    %545 = arith.select %543, %532, %544 : vector<8x32xi1>, vector<8x32xf32>
    %c0_127 = arith.constant 0 : index
    %c0_128 = arith.constant 0 : index
    %c0_129 = arith.constant 0 : index
    %546 = vector.load %arg7[%c0_127, %c0_128, %c0_129] : memref<8x8x32xf32, #tpu.memory_space<vmem>>, vector<1x8x32xf32>
    %547 = vector.shape_cast %546 : vector<1x8x32xf32> to vector<8x32xf32>
    %548 = vector.shape_cast %545 : vector<8x32xf32> to vector<1x8x32xf32>
    tpu.vector_store %arg7[%c0_127, %c0_128, %c0_129], %548 {strides = array<i32>} : memref<8x8x32xf32, #tpu.memory_space<vmem>>, vector<1x8x32xf32>,
    return
  }
}

</mosaic_0001>

<llo_original>
// kernel: encoder_forward.1
$region0: #{encoder_forward.1}
  #allocation0 [shape = 'u32[]', space=smem, size = 0x4, offset = 0x4, fixed_abs, tag = 'smem constant byte address 0x4 - core index']
  #allocation1 [shape = 'u32[144,128]{1,0:T(1,128)}', space=vmem, size = 0x12000, scoped, tag = 'internal scratch']
  #allocation2 [shape = 'f32[64,256]{1,0:T(8,128)}', space=vmem, size = 0x10000, scoped, tag = 'scratch operand']
  %s0 = inlined_call_operand.vmem [shape: bf16[64,16], index: 0, kind: input, shape index: {}]
  %s1 = inlined_call_operand.vmem [shape: s32[8,1], index: 1, kind: input, shape index: {}]
  %s2 = inlined_call_operand.vmem [shape: bf16[16,256], index: 2, kind: input, shape index: {}]
  %s3 = inlined_call_operand.vmem [shape: bf16[32,128], index: 3, kind: input, shape index: {}]
  %s4 = inlined_call_operand.vmem [shape: bf16[32,128], index: 4, kind: input, shape index: {}]
  %s5 = inlined_call_operand.vmem [shape: f32[1,256], index: 5, kind: input, shape index: {}]
  %s6 = inlined_call_operand.vmem [shape: f32[8,8,32], index: 6, kind: output, shape index: {0}]
  %s7 = inlined_call_operand.vmem [shape: f32[8,8,32], index: 7, kind: output, shape index: {1}]
  %8 = xla_tuple %s6, %s7
  %s9 = sld [smem:[#allocation0]]
  $region42: #{encoder_forward.1} parent=0
    _
  %s11 = ssub.s32 1, %s9
  %s12 = scalar_select 0, %s11, %s9
  // Predicated region
  $region2: #{encoder_forward.1} parent=0 // pred_check
    _
  $region3: #{encoder_forward.1} parent=0 // pred_check_branch
    %14 = sbr.rel (0) target = $region5
  $region4: #{encoder_forward.1} parent=0 // pred_region
    _
  $region5: #{encoder_forward.1} parent=0 // pred_fallthru
    _
  // Predicated region
  $region6: #{encoder_forward.1} parent=0 // pred_check
    _
  $region7: #{encoder_forward.1} parent=0 // pred_check_branch
    %16 = sbr.rel (0) target = $region9
  $region8: #{encoder_forward.1} parent=0 // pred_region
    _
  $region9: #{encoder_forward.1} parent=0 // pred_fallthru
    _
  // Predicated region
  $region10: #{encoder_forward.1} parent=0 // pred_check
    _
  $region11: #{encoder_forward.1} parent=0 // pred_check_branch
    %18 = sbr.rel (0) target = $region13
  $region12: #{encoder_forward.1} parent=0 // pred_region
    _
  $region13: #{encoder_forward.1} parent=0 // pred_fallthru
    _
  // Predicated region
  $region14: #{encoder_forward.1} parent=0 // pred_check
    _
  $region15: #{encoder_forward.1} parent=0 // pred_check_branch
    %20 = sbr.rel (0) target = $region17
  $region16: #{encoder_forward.1} parent=0 // pred_region
    _
  $region17: #{encoder_forward.1} parent=0 // pred_fallthru
    _
  // Predicated region
  $region18: #{encoder_forward.1} parent=0 // pred_check
    _
  $region19: #{encoder_forward.1} parent=0 // pred_check_branch
    %22 = sbr.rel (0) target = $region21
  $region20: #{encoder_forward.1} parent=0 // pred_region
    _
  $region21: #{encoder_forward.1} parent=0 // pred_fallthru
    _
  // Predicated region
  $region22: #{encoder_forward.1} parent=0 // pred_check
    _
  $region23: #{encoder_forward.1} parent=0 // pred_check_branch
    %24 = sbr.rel (0) target = $region25
  $region24: #{encoder_forward.1} parent=0 // pred_region
    _
  $region25: #{encoder_forward.1} parent=0 // pred_fallthru
    _
  %v26 = vld [vmem:[%s0] sm:$0xf]
  %v27 = vld [vmem:[%s0 + $0x4] sm:$0xf]
  %v28 = vld [vmem:[%s0 + $0x8] sm:$0xf]
  %v29 = vld [vmem:[%s0 + $0xc] sm:$0xf]
  %v30 = vld [vmem:[%s0 + $0x10] sm:$0xf]
  %v31 = vld [vmem:[%s0 + $0x14] sm:$0xf]
  %v32 = vld [vmem:[%s0 + $0x18] sm:$0xf]
  %v33 = vld [vmem:[%s0 + $0x1c] sm:$0xf]
  %v34 = vld [vmem:[%s2] sm:$0xff]
  %v35 = vld [vmem:[%s2 + $0x8] sm:$0xff]
  %v36 = vld [vmem:[%s5] sm:$0x3]
  %v38 = vlaneseq
  %v39 = vshrl.u32 %v38, 7
  %v40 = vsub.s32 0, %v39
  %v41 = vrot.slane %v36, %v40
  %v42 = vlaneseq
  %v43 = vshrl.u32 %v42, 7
  %v44 = vsub.s32 1, %v43
  %v45 = vrot.slane %v36, %v44
  %v56 = vunpack.c.l.b16 %v26
  %v57 = vunpack.c.l.b16 %v27
  %v58 = vunpack.c.l.b16 %v28
  %v59 = vunpack.c.l.b16 %v29
  %v60 = vunpack.c.l.b16 %v30
  %v61 = vunpack.c.l.b16 %v31
  %v62 = vunpack.c.l.b16 %v32
  %v63 = vunpack.c.l.b16 %v33
  %v64 = vpack.c.b16 %v57, %v56
  %v65 = vpack.c.b16 %v59, %v58
  %v66 = vpack.c.b16 %v61, %v60
  %v67 = vpack.c.b16 %v63, %v62
  %v70 = vunpack.c.l.b16 %v34
  %v71 = vunpack.c.h.b16 %v34
  %v72 = vunpack.c.l.b16 %v35
  %v73 = vunpack.c.h.b16 %v35
  %v74 = vpack.c.b16 %v72, %v70
  %v75 = vpack.c.b16 %v73, %v71
  %vm78 = vcmask 130048
  %v80 = vsel %vm78, %v64, 0
  %v83 = vsel %vm78, %v65, 0
  %v86 = vsel %vm78, %v66, 0
  %v89 = vsel %vm78, %v67, 0
  %91 = vmatprep.subr.bf16.mxu0 %v75
  %92 = vmatpush1.bf16.msra.mxu0 %v74
  %93 = vmatprep.subr.bf16.mxu0 0
  %94 = vmatpush1.bf16.msra.mxu0 0
  %95 = vmatprep.subr.bf16.mxu0 0
  %96 = vmatpush1.bf16.msra.mxu0 0
  %97 = vmatprep.subr.bf16.mxu0 0
  %98 = vmatpush1.bf16.msra.mxu0 0
  %99 = vmatprep.subr.bf16.mxu0 0
  %100 = vmatpush1.bf16.msra.mxu0 0
  %101 = vmatprep.subr.bf16.mxu0 0
  %102 = vmatpush1.bf16.msra.mxu0 0
  %103 = vmatprep.subr.bf16.mxu0 0
  %104 = vmatpush1.bf16.msra.mxu0 0
  %105 = vmatprep.subr.bf16.mxu0 0
  %106 = vmatpush1.bf16.msra.mxu0 0
  %107 = vmatprep.subr.bf16.mxu0 0
  %108 = vmatpush1.bf16.msra.mxu0 0
  %109 = vmatprep.subr.bf16.mxu0 0
  %110 = vmatpush1.bf16.msra.mxu0 0
  %111 = vmatprep.subr.bf16.mxu0 0
  %112 = vmatpush1.bf16.msra.mxu0 0
  %113 = vmatprep.subr.bf16.mxu0 0
  %114 = vmatpush1.bf16.msra.mxu0 0
  %115 = vmatprep.subr.bf16.mxu0 0
  %116 = vmatpush1.bf16.msra.mxu0 0
  %117 = vmatprep.subr.bf16.mxu0 0
  %118 = vmatpush1.bf16.msra.mxu0 0
  %119 = vmatprep.subr.bf16.mxu0 0
  %120 = vmatpush1.bf16.msra.mxu0 0
  %121 = vmatprep.subr.bf16.mxu0 0
  %122 = vmatpush1.bf16.msra.mxu0 0
  %123 = vmatprep.mubr.bf16.mxu0 0
  %124 = vmatmul.mubr.bf16.gmra.mrb[0].mxu0 %v80
  %v125 = vpop.f32.mrb[0].mxu0
  %v126 = vadd.f32 %v41, %v125
  %v127 = vpop.f32.mrb[0].mxu0
  %v128 = vadd.f32 %v45, %v127
  %v129 = vpop.f32.mrb[0].mxu0
  %v130 = vadd.f32 %v41, %v129
  %v131 = vpop.f32.mrb[0].mxu0
  %v132 = vadd.f32 %v45, %v131
  %133 = vmatprep.mubr.bf16.mxu0 0
  %134 = vmatmul.mubr.bf16.gmra.mrb[0].mxu0 %v83
  %v135 = vpop.f32.mrb[0].mxu0
  %v136 = vadd.f32 %v41, %v135
  %v137 = vpop.f32.mrb[0].mxu0
  %v138 = vadd.f32 %v45, %v137
  %v139 = vpop.f32.mrb[0].mxu0
  %v140 = vadd.f32 %v41, %v139
  %v141 = vpop.f32.mrb[0].mxu0
  %v142 = vadd.f32 %v45, %v141
  %143 = vmatprep.mubr.bf16.mxu0 0
  %144 = vmatmul.mubr.bf16.gmra.mrb[0].mxu0 %v86
  %v145 = vpop.f32.mrb[0].mxu0
  %v146 = vadd.f32 %v41, %v145
  %v147 = vpop.f32.mrb[0].mxu0
  %v148 = vadd.f32 %v45, %v147
  %v149 = vpop.f32.mrb[0].mxu0
  %v150 = vadd.f32 %v41, %v149
  %v151 = vpop.f32.mrb[0].mxu0
  %v152 = vadd.f32 %v45, %v151
  %153 = vmatprep.mubr.bf16.mxu0 0
  %154 = vmatmul.mubr.bf16.gmra.mrb[0].mxu0 %v89
  %v155 = vpop.f32.mrb[0].mxu0
  %v156 = vadd.f32 %v41, %v155
  %v157 = vpop.f32.mrb[0].mxu0
  %v158 = vadd.f32 %v45, %v157
  %v159 = vpop.f32.mrb[0].mxu0
  %v160 = vadd.f32 %v41, %v159
  %v161 = vpop.f32.mrb[0].mxu0
  %v162 = vadd.f32 %v45, %v161
  %163 = vdwg.mxu0
  %164 = vst [vmem:[#allocation2] sm:$0xff] %v126
  %165 = vst [vmem:[#allocation2 + $0x8] sm:$0xff] %v128
  %166 = vst [vmem:[#allocation2 + $0x10] sm:$0xff] %v130
  %167 = vst [vmem:[#allocation2 + $0x18] sm:$0xff] %v132
  %168 = vst [vmem:[#allocation2 + $0x20] sm:$0xff] %v136
  %169 = vst [vmem:[#allocation2 + $0x28] sm:$0xff] %v138
  %170 = vst [vmem:[#allocation2 + $0x30] sm:$0xff] %v140
  %171 = vst [vmem:[#allocation2 + $0x38] sm:$0xff] %v142
  %172 = vst [vmem:[#allocation2 + $0x40] sm:$0xff] %v146
  %173 = vst [vmem:[#allocation2 + $0x48] sm:$0xff] %v148
  %174 = vst [vmem:[#allocation2 + $0x50] sm:$0xff] %v150
  %175 = vst [vmem:[#allocation2 + $0x58] sm:$0xff] %v152
  %176 = vst [vmem:[#allocation2 + $0x60] sm:$0xff] %v156
  %177 = vst [vmem:[#allocation2 + $0x68] sm:$0xff] %v158
  %178 = vst [vmem:[#allocation2 + $0x70] sm:$0xff] %v160
  %179 = vst [vmem:[#allocation2 + $0x78] sm:$0xff] %v162
  %v180 = vld [vmem:[%s3] sm:$0xf]
  %v181 = vld [vmem:[%s3 + $0x4] sm:$0xf]
  %v182 = vld [vmem:[%s3 + $0x8] sm:$0xf]
  %v183 = vld [vmem:[%s3 + $0xc] sm:$0xf]
  %v184 = vld [vmem:[%s4] sm:$0xf]
  %v185 = vld [vmem:[%s4 + $0x4] sm:$0xf]
  %v186 = vld [vmem:[%s4 + $0x8] sm:$0xf]
  %v187 = vld [vmem:[%s4 + $0xc] sm:$0xf]
  %v188 = vlaneseq
  %v189 = vand.u32 %v188, 127
  %v190 = vld [vmem:[%s1] sm:$0xff]
  %191 = vset.pattern.permute.xlu0 0
  %192 = vperm.xlu0 %191, %v190
  %v193 = vpop.permute.xlu0 %192
  %vm194 = vcmp.lt.s32.totalorder %v189, %v193
  %v195 = vld [vmem:[#allocation2] sm:$0xff]
  %v200 = vunpack.c.l.b16 %v180
  %v201 = vunpack.c.l.b16 %v181
  %v202 = vunpack.c.l.b16 %v182
  %v203 = vunpack.c.l.b16 %v183
  %v204 = vpack.c.b16 %v201, %v200
  %v205 = vpack.c.b16 %v203, %v202
  %vm208 = vcmask 261120
  %v210 = vsel %vm208, 0, 0
  %212 = vmatprep.subr.bf16.mxu0 0
  %213 = vmatpush1.bf16.msra.mxu0 %v204
  %214 = vmatprep.subr.bf16.mxu0 0
  %215 = vmatpush1.bf16.msra.mxu0 %v205
  %216 = vmatprep.subr.bf16.mxu0 0
  %217 = vmatpush1.bf16.msra.mxu0 0
  %218 = vmatprep.subr.bf16.mxu0 0
  %219 = vmatpush1.bf16.msra.mxu0 0
  %220 = vmatprep.subr.bf16.mxu0 0
  %221 = vmatpush1.bf16.msra.mxu0 0
  %222 = vmatprep.subr.bf16.mxu0 0
  %223 = vmatpush1.bf16.msra.mxu0 0
  %224 = vmatprep.subr.bf16.mxu0 0
  %225 = vmatpush1.bf16.msra.mxu0 0
  %226 = vmatprep.subr.bf16.mxu0 0
  %227 = vmatpush1.bf16.msra.mxu0 0
  %228 = vmatprep.subr.bf16.mxu0 0
  %229 = vmatpush1.bf16.msra.mxu0 0
  %230 = vmatprep.subr.bf16.mxu0 0
  %231 = vmatpush1.bf16.msra.mxu0 0
  %232 = vmatprep.subr.bf16.mxu0 0
  %233 = vmatpush1.bf16.msra.mxu0 0
  %234 = vmatprep.subr.bf16.mxu0 0
  %235 = vmatpush1.bf16.msra.mxu0 0
  %236 = vmatprep.subr.bf16.mxu0 0
  %237 = vmatpush1.bf16.msra.mxu0 0
  %238 = vmatprep.subr.bf16.mxu0 0
  %239 = vmatpush1.bf16.msra.mxu0 0
  %240 = vmatprep.subr.bf16.mxu0 0
  %241 = vmatpush1.bf16.msra.mxu0 0
  %242 = vmatprep.subr.bf16.mxu0 0
  %243 = vmatpush1.bf16.msra.mxu0 0
  %244 = vmatprep.mubr.bf16.mxu0 0
  %245 = vmatmul.mubr.bf16.gmra.mrb[0].mxu0 %v210
  %v246 = vpop.f32.mrb[0].mxu0
  %v247 = vadd.f32 0.0, %v246
  %v248 = vpop.f32.mrb[0].mxu0
  %v249 = vpop.f32.mrb[0].mxu0
  %v250 = vpop.f32.mrb[0].mxu0
  %251 = vdwg.mxu0
  %v252 = vadd.f32 %v195, %v247
  %v253 = vld [vmem:[#allocation2 + $0x78] sm:$0xff]
  %v258 = vunpack.c.l.b16 %v184
  %v259 = vunpack.c.l.b16 %v185
  %v260 = vunpack.c.l.b16 %v186
  %v261 = vunpack.c.l.b16 %v187
  %v262 = vpack.c.b16 %v259, %v258
  %v263 = vpack.c.b16 %v261, %v260
  %266 = vmatprep.subr.bf16.mxu0 0
  %267 = vmatpush1.bf16.msra.mxu0 %v262
  %268 = vmatprep.subr.bf16.mxu0 0
  %269 = vmatpush1.bf16.msra.mxu0 %v263
  %270 = vmatprep.subr.bf16.mxu0 0
  %271 = vmatpush1.bf16.msra.mxu0 0
  %272 = vmatprep.subr.bf16.mxu0 0
  %273 = vmatpush1.bf16.msra.mxu0 0
  %274 = vmatprep.subr.bf16.mxu0 0
  %275 = vmatpush1.bf16.msra.mxu0 0
  %276 = vmatprep.subr.bf16.mxu0 0
  %277 = vmatpush1.bf16.msra.mxu0 0
  %278 = vmatprep.subr.bf16.mxu0 0
  %279 = vmatpush1.bf16.msra.mxu0 0
  %280 = vmatprep.subr.bf16.mxu0 0
  %281 = vmatpush1.bf16.msra.mxu0 0
  %282 = vmatprep.subr.bf16.mxu0 0
  %283 = vmatpush1.bf16.msra.mxu0 0
  %284 = vmatprep.subr.bf16.mxu0 0
  %285 = vmatpush1.bf16.msra.mxu0 0
  %286 = vmatprep.subr.bf16.mxu0 0
  %287 = vmatpush1.bf16.msra.mxu0 0
  %288 = vmatprep.subr.bf16.mxu0 0
  %289 = vmatpush1.bf16.msra.mxu0 0
  %290 = vmatprep.subr.bf16.mxu0 0
  %291 = vmatpush1.bf16.msra.mxu0 0
  %292 = vmatprep.subr.bf16.mxu0 0
  %293 = vmatpush1.bf16.msra.mxu0 0
  %294 = vmatprep.subr.bf16.mxu0 0
  %295 = vmatpush1.bf16.msra.mxu0 0
  %296 = vmatprep.subr.bf16.mxu0 0
  %297 = vmatpush1.bf16.msra.mxu0 0
  %298 = vmatprep.mubr.bf16.mxu0 0
  %299 = vmatmul.mubr.bf16.gmra.mrb[0].mxu0 %v210
  %v300 = vpop.f32.mrb[0].mxu0
  %v301 = vadd.f32 0.0, %v300
  %v302 = vpop.f32.mrb[0].mxu0
  %v303 = vpop.f32.mrb[0].mxu0
  %v304 = vpop.f32.mrb[0].mxu0
  %305 = vdwg.mxu0
  %v306 = vadd.f32 %v253, %v301
  %v307 = vxor.u32 %v252, 2147483648
  %v308 = vmul.f32 %v307, 1.442695
  %v309 = vpow.pop %v308
  %v310 = vadd.f32 %v309, 1.0
  %v311 = vrcp.pop %v310
  %v312 = vmul.f32 1.0, %v311
  %v313 = vtanh.pop %v252
  %v314 = vmul.f32 %v312, 0.0
  %316 = vrot.lane.b32.xlu0 %v313, 32
  %v317 = vpop.permute.xlu0 %316
  %v319 = vmul.f32 %v312, %v317
  %321 = vrot.lane.b32.xlu0 %v319, 32
  %v322 = vpop.permute.xlu0 %321
  %v324 = vadd.f32 %v314, %v322
  %v325 = vtanh.pop %v324
  %327 = vrot.lane.b32.xlu0 %v325, 32
  %v328 = vpop.permute.xlu0 %327
  %v330 = vmul.f32 %v312, %v328
  %v331 = vxor.u32 %v306, 2147483648
  %v332 = vmul.f32 %v331, 1.442695
  %v333 = vpow.pop %v332
  %v334 = vadd.f32 %v333, 1.0
  %v335 = vrcp.pop %v334
  %v336 = vmul.f32 1.0, %v335
  %v337 = vtanh.pop %v306
  %v338 = vmul.f32 %v336, 0.0
  %340 = vrot.lane.b32.xlu0 %v337, 32
  %v341 = vpop.permute.xlu0 %340
  %v343 = vmul.f32 %v336, %v341
  %345 = vrot.lane.b32.xlu0 %v343, 32
  %v346 = vpop.permute.xlu0 %345
  %v348 = vadd.f32 %v338, %v346
  %v349 = vtanh.pop %v348
  %351 = vrot.lane.b32.xlu0 %v349, 32
  %v352 = vpop.permute.xlu0 %351
  %v354 = vmul.f32 %v336, %v352
  %v355 = vsel %vm194, 1, 0
  %356 = vset.pattern.permute.xlu0 0
  %357 = vperm.xlu0 %356, %v355
  %v358 = vpop.permute.xlu0 %357
  %vm359 = vcmp.eq.s32.totalorder %v358, 1
  %v360 = vsel %vm359, %v330, 0.0
  %v361 = vsel %vm359, %v324, 0.0
  %362 = vset.pattern.permute.xlu0 7
  %363 = vperm.xlu0 %362, %v355
  %v364 = vpop.permute.xlu0 %363
  %vm365 = vcmp.eq.s32.totalorder %v364, 1
  %v366 = vsel %vm365, %v354, 0.0
  %v367 = vsel %vm365, %v348, 0.0
  %369 = vrot.lane.b32.xlu0 %v360, 64
  %v370 = vpop.permute.xlu0 %369
  %372 = vst.msk [vmem:[%s6] sm:$0xff] %vm208, %v370
  %374 = vrot.lane.b32.xlu0 %v366, 64
  %v375 = vpop.permute.xlu0 %374
  %s377 = scalar_lea.vmem %s7, 56
  %378 = vst.msk [vmem:[%s377] sm:$0xff] %vm208, %v375
  %v379 = vld [vmem:[#allocation2 + $0x10] sm:$0xff]
  %v380 = vpack.c.bf16 %v360, %v360
  %382 = vrot.lane.b32.xlu0 %v380, 64
  %v383 = vpop.permute.xlu0 %382
  %v385 = vsel %vm208, %v383, 0
  %387 = vmatprep.subr.bf16.mxu0 0
  %388 = vmatpush1.bf16.msra.mxu0 %v204
  %389 = vmatprep.subr.bf16.mxu0 0
  %390 = vmatpush1.bf16.msra.mxu0 %v205
  %391 = vmatprep.subr.bf16.mxu0 0
  %392 = vmatpush1.bf16.msra.mxu0 0
  %393 = vmatprep.subr.bf16.mxu0 0
  %394 = vmatpush1.bf16.msra.mxu0 0
  %395 = vmatprep.subr.bf16.mxu0 0
  %396 = vmatpush1.bf16.msra.mxu0 0
  %397 = vmatprep.subr.bf16.mxu0 0
  %398 = vmatpush1.bf16.msra.mxu0 0
  %399 = vmatprep.subr.bf16.mxu0 0
  %400 = vmatpush1.bf16.msra.mxu0 0
  %401 = vmatprep.subr.bf16.mxu0 0
  %402 = vmatpush1.bf16.msra.mxu0 0
  %403 = vmatprep.subr.bf16.mxu0 0
  %404 = vmatpush1.bf16.msra.mxu0 0
  %405 = vmatprep.subr.bf16.mxu0 0
  %406 = vmatpush1.bf16.msra.mxu0 0
  %407 = vmatprep.subr.bf16.mxu0 0
  %408 = vmatpush1.bf16.msra.mxu0 0
  %409 = vmatprep.subr.bf16.mxu0 0
  %410 = vmatpush1.bf16.msra.mxu0 0
  %411 = vmatprep.subr.bf16.mxu0 0
  %412 = vmatpush1.bf16.msra.mxu0 0
  %413 = vmatprep.subr.bf16.mxu0 0
  %414 = vmatpush1.bf16.msra.mxu0 0
  %415 = vmatprep.subr.bf16.mxu0 0
  %416 = vmatpush1.bf16.msra.mxu0 0
  %417 = vmatprep.subr.bf16.mxu0 0
  %418 = vmatpush1.bf16.msra.mxu0 0
  %419 = vmatprep.mubr.bf16.mxu0 0
  %420 = vmatmul.mubr.bf16.gmra.mrb[0].mxu0 %v385
  %v421 = vpop.f32.mrb[0].mxu0
  %v422 = vadd.f32 0.0, %v421
  %v423 = vpop.f32.mrb[0].mxu0
  %v424 = vpop.f32.mrb[0].mxu0
  %v425 = vpop.f32.mrb[0].mxu0
  %426 = vdwg.mxu0
  %v427 = vadd.f32 %v379, %v422
  %v428 = vld [vmem:[#allocation2 + $0x68] sm:$0xff]
  %v429 = vpack.c.bf16 %v366, %v366
  %431 = vrot.lane.b32.xlu0 %v429, 64
  %v432 = vpop.permute.xlu0 %431
  %v434 = vsel %vm208, %v432, 0
  %436 = vmatprep.subr.bf16.mxu0 0
  %437 = vmatpush1.bf16.msra.mxu0 %v262
  %438 = vmatprep.subr.bf16.mxu0 0
  %439 = vmatpush1.bf16.msra.mxu0 %v263
  %440 = vmatprep.subr.bf16.mxu0 0
  %441 = vmatpush1.bf16.msra.mxu0 0
  %442 = vmatprep.subr.bf16.mxu0 0
  %443 = vmatpush1.bf16.msra.mxu0 0
  %444 = vmatprep.subr.bf16.mxu0 0
  %445 = vmatpush1.bf16.msra.mxu0 0
  %446 = vmatprep.subr.bf16.mxu0 0
  %447 = vmatpush1.bf16.msra.mxu0 0
  %448 = vmatprep.subr.bf16.mxu0 0
  %449 = vmatpush1.bf16.msra.mxu0 0
  %450 = vmatprep.subr.bf16.mxu0 0
  %451 = vmatpush1.bf16.msra.mxu0 0
  %452 = vmatprep.subr.bf16.mxu0 0
  %453 = vmatpush1.bf16.msra.mxu0 0
  %454 = vmatprep.subr.bf16.mxu0 0
  %455 = vmatpush1.bf16.msra.mxu0 0
  %456 = vmatprep.subr.bf16.mxu0 0
  %457 = vmatpush1.bf16.msra.mxu0 0
  %458 = vmatprep.subr.bf16.mxu0 0
  %459 = vmatpush1.bf16.msra.mxu0 0
  %460 = vmatprep.subr.bf16.mxu0 0
  %461 = vmatpush1.bf16.msra.mxu0 0
  %462 = vmatprep.subr.bf16.mxu0 0
  %463 = vmatpush1.bf16.msra.mxu0 0
  %464 = vmatprep.subr.bf16.mxu0 0
  %465 = vmatpush1.bf16.msra.mxu0 0
  %466 = vmatprep.subr.bf16.mxu0 0
  %467 = vmatpush1.bf16.msra.mxu0 0
  %468 = vmatprep.mubr.bf16.mxu0 0
  %469 = vmatmul.mubr.bf16.gmra.mrb[0].mxu0 %v434
  %v470 = vpop.f32.mrb[0].mxu0
  %v471 = vadd.f32 0.0, %v470
  %v472 = vpop.f32.mrb[0].mxu0
  %v473 = vpop.f32.mrb[0].mxu0
  %v474 = vpop.f32.mrb[0].mxu0
  %475 = vdwg.mxu0
  %v476 = vadd.f32 %v428, %v471
  %v477 = vxor.u32 %v427, 2147483648
  %v478 = vmul.f32 %v477, 1.442695
  %v479 = vpow.pop %v478
  %v480 = vadd.f32 %v479, 1.0
  %v481 = vrcp.pop %v480
  %v482 = vmul.f32 1.0, %v481
  %v483 = vtanh.pop %v427
  %v484 = vmul.f32 %v482, %v361
  %486 = vrot.lane.b32.xlu0 %v483, 32
  %v487 = vpop.permute.xlu0 %486
  %v489 = vmul.f32 %v482, %v487
  %491 = vrot.lane.b32.xlu0 %v489, 32
  %v492 = vpop.permute.xlu0 %491
  %v494 = vadd.f32 %v484, %v492
  %v495 = vtanh.pop %v494
  %497 = vrot.lane.b32.xlu0 %v495, 32
  %v498 = vpop.permute.xlu0 %497
  %v500 = vmul.f32 %v482, %v498
  %v501 = vxor.u32 %v476, 2147483648
  %v502 = vmul.f32 %v501, 1.442695
  %v503 = vpow.pop %v502
  %v504 = vadd.f32 %v503, 1.0
  %v505 = vrcp.pop %v504
  %v506 = vmul.f32 1.0, %v505
  %v507 = vtanh.pop %v476
  %v508 = vmul.f32 %v506, %v367
  %510 = vrot.lane.b32.xlu0 %v507, 32
  %v511 = vpop.permute.xlu0 %510
  %v513 = vmul.f32 %v506, %v511
  %515 = vrot.lane.b32.xlu0 %v513, 32
  %v516 = vpop.permute.xlu0 %515
  %v518 = vadd.f32 %v508, %v516
  %v519 = vtanh.pop %v518
  %521 = vrot.lane.b32.xlu0 %v519, 32
  %v522 = vpop.permute.xlu0 %521
  %v524 = vmul.f32 %v506, %v522
  %525 = vset.pattern.permute.xlu0 1
  %526 = vperm.xlu0 %525, %v355
  %v527 = vpop.permute.xlu0 %526
  %vm528 = vcmp.eq.s32.totalorder %v527, 1
  %v529 = vsel %vm528, %v500, %v360
  %v530 = vsel %vm528, %v494, %v361
  %531 = vset.pattern.permute.xlu0 6
  %532 = vperm.xlu0 %531, %v355
  %v533 = vpop.permute.xlu0 %532
  %vm534 = vcmp.eq.s32.totalorder %v533, 1
  %v535 = vsel %vm534, %v524, %v366
  %v536 = vsel %vm534, %v518, %v367
  %v537 = vsel %vm528, %v500, 0.0
  %539 = vrot.lane.b32.xlu0 %v537, 64
  %v540 = vpop.permute.xlu0 %539
  %s542 = scalar_lea.vmem %s6, 8
  %543 = vst.msk [vmem:[%s542] sm:$0xff] %vm208, %v540
  %v544 = vsel %vm534, %v524, 0.0
  %546 = vrot.lane.b32.xlu0 %v544, 64
  %v547 = vpop.permute.xlu0 %546
  %s549 = scalar_lea.vmem %s7, 48
  %550 = vst.msk [vmem:[%s549] sm:$0xff] %vm208, %v547
  %v551 = vld [vmem:[#allocation2 + $0x20] sm:$0xff]
  %v552 = vpack.c.bf16 %v529, %v529
  %554 = vrot.lane.b32.xlu0 %v552, 64
  %v555 = vpop.permute.xlu0 %554
  %v557 = vsel %vm208, %v555, 0
  %559 = vmatprep.subr.bf16.mxu0 0
  %560 = vmatpush1.bf16.msra.mxu0 %v204
  %561 = vmatprep.subr.bf16.mxu0 0
  %562 = vmatpush1.bf16.msra.mxu0 %v205
  %563 = vmatprep.subr.bf16.mxu0 0
  %564 = vmatpush1.bf16.msra.mxu0 0
  %565 = vmatprep.subr.bf16.mxu0 0
  %566 = vmatpush1.bf16.msra.mxu0 0
  %567 = vmatprep.subr.bf16.mxu0 0
  %568 = vmatpush1.bf16.msra.mxu0 0
  %569 = vmatprep.subr.bf16.mxu0 0
  %570 = vmatpush1.bf16.msra.mxu0 0
  %571 = vmatprep.subr.bf16.mxu0 0
  %572 = vmatpush1.bf16.msra.mxu0 0
  %573 = vmatprep.subr.bf16.mxu0 0
  %574 = vmatpush1.bf16.msra.mxu0 0
  %575 = vmatprep.subr.bf16.mxu0 0
  %576 = vmatpush1.bf16.msra.mxu0 0
  %577 = vmatprep.subr.bf16.mxu0 0
  %578 = vmatpush1.bf16.msra.mxu0 0
  %579 = vmatprep.subr.bf16.mxu0 0
  %580 = vmatpush1.bf16.msra.mxu0 0
  %581 = vmatprep.subr.bf16.mxu0 0
  %582 = vmatpush1.bf16.msra.mxu0 0
  %583 = vmatprep.subr.bf16.mxu0 0
  %584 = vmatpush1.bf16.msra.mxu0 0
  %585 = vmatprep.subr.bf16.mxu0 0
  %586 = vmatpush1.bf16.msra.mxu0 0
  %587 = vmatprep.subr.bf16.mxu0 0
  %588 = vmatpush1.bf16.msra.mxu0 0
  %589 = vmatprep.subr.bf16.mxu0 0
  %590 = vmatpush1.bf16.msra.mxu0 0
  %591 = vmatprep.mubr.bf16.mxu0 0
  %592 = vmatmul.mubr.bf16.gmra.mrb[0].mxu0 %v557
  %v593 = vpop.f32.mrb[0].mxu0
  %v594 = vadd.f32 0.0, %v593
  %v595 = vpop.f32.mrb[0].mxu0
  %v596 = vpop.f32.mrb[0].mxu0
  %v597 = vpop.f32.mrb[0].mxu0
  %598 = vdwg.mxu0
  %v599 = vadd.f32 %v551, %v594
  %v600 = vld [vmem:[#allocation2 + $0x58] sm:$0xff]
  %v601 = vpack.c.bf16 %v535, %v535
  %603 = vrot.lane.b32.xlu0 %v601, 64
  %v604 = vpop.permute.xlu0 %603
  %v606 = vsel %vm208, %v604, 0
  %608 = vmatprep.subr.bf16.mxu0 0
  %609 = vmatpush1.bf16.msra.mxu0 %v262
  %610 = vmatprep.subr.bf16.mxu0 0
  %611 = vmatpush1.bf16.msra.mxu0 %v263
  %612 = vmatprep.subr.bf16.mxu0 0
  %613 = vmatpush1.bf16.msra.mxu0 0
  %614 = vmatprep.subr.bf16.mxu0 0
  %615 = vmatpush1.bf16.msra.mxu0 0
  %616 = vmatprep.subr.bf16.mxu0 0
  %617 = vmatpush1.bf16.msra.mxu0 0
  %618 = vmatprep.subr.bf16.mxu0 0
  %619 = vmatpush1.bf16.msra.mxu0 0
  %620 = vmatprep.subr.bf16.mxu0 0
  %621 = vmatpush1.bf16.msra.mxu0 0
  %622 = vmatprep.subr.bf16.mxu0 0
  %623 = vmatpush1.bf16.msra.mxu0 0
  %624 = vmatprep.subr.bf16.mxu0 0
  %625 = vmatpush1.bf16.msra.mxu0 0
  %626 = vmatprep.subr.bf16.mxu0 0
  %627 = vmatpush1.bf16.msra.mxu0 0
  %628 = vmatprep.subr.bf16.mxu0 0
  %629 = vmatpush1.bf16.msra.mxu0 0
  %630 = vmatprep.subr.bf16.mxu0 0
  %631 = vmatpush1.bf16.msra.mxu0 0
  %632 = vmatprep.subr.bf16.mxu0 0
  %633 = vmatpush1.bf16.msra.mxu0 0
  %634 = vmatprep.subr.bf16.mxu0 0
  %635 = vmatpush1.bf16.msra.mxu0 0
  %636 = vmatprep.subr.bf16.mxu0 0
  %637 = vmatpush1.bf16.msra.mxu0 0
  %638 = vmatprep.subr.bf16.mxu0 0
  %639 = vmatpush1.bf16.msra.mxu0 0
  %640 = vmatprep.mubr.bf16.mxu0 0
  %641 = vmatmul.mubr.bf16.gmra.mrb[0].mxu0 %v606
  %v642 = vpop.f32.mrb[0].mxu0
  %v643 = vadd.f32 0.0, %v642
  %v644 = vpop.f32.mrb[0].mxu0
  %v645 = vpop.f32.mrb[0].mxu0
  %v646 = vpop.f32.mrb[0].mxu0
  %647 = vdwg.mxu0
  %v648 = vadd.f32 %v600, %v643
  %v649 = vxor.u32 %v599, 2147483648
  %v650 = vmul.f32 %v649, 1.442695
  %v651 = vpow.pop %v650
  %v652 = vadd.f32 %v651, 1.0
  %v653 = vrcp.pop %v652
  %v654 = vmul.f32 1.0, %v653
  %v655 = vtanh.pop %v599
  %v656 = vmul.f32 %v654, %v530
  %658 = vrot.lane.b32.xlu0 %v655, 32
  %v659 = vpop.permute.xlu0 %658
  %v661 = vmul.f32 %v654, %v659
  %663 = vrot.lane.b32.xlu0 %v661, 32
  %v664 = vpop.permute.xlu0 %663
  %v666 = vadd.f32 %v656, %v664
  %v667 = vtanh.pop %v666
  %669 = vrot.lane.b32.xlu0 %v667, 32
  %v670 = vpop.permute.xlu0 %669
  %v672 = vmul.f32 %v654, %v670
  %v673 = vxor.u32 %v648, 2147483648
  %v674 = vmul.f32 %v673, 1.442695
  %v675 = vpow.pop %v674
  %v676 = vadd.f32 %v675, 1.0
  %v677 = vrcp.pop %v676
  %v678 = vmul.f32 1.0, %v677
  %v679 = vtanh.pop %v648
  %v680 = vmul.f32 %v678, %v536
  %682 = vrot.lane.b32.xlu0 %v679, 32
  %v683 = vpop.permute.xlu0 %682
  %v685 = vmul.f32 %v678, %v683
  %687 = vrot.lane.b32.xlu0 %v685, 32
  %v688 = vpop.permute.xlu0 %687
  %v690 = vadd.f32 %v680, %v688
  %v691 = vtanh.pop %v690
  %693 = vrot.lane.b32.xlu0 %v691, 32
  %v694 = vpop.permute.xlu0 %693
  %v696 = vmul.f32 %v678, %v694
  %697 = vset.pattern.permute.xlu0 2
  %698 = vperm.xlu0 %697, %v355
  %v699 = vpop.permute.xlu0 %698
  %vm700 = vcmp.eq.s32.totalorder %v699, 1
  %v701 = vsel %vm700, %v672, %v529
  %v702 = vsel %vm700, %v666, %v530
  %703 = vset.pattern.permute.xlu0 5
  %704 = vperm.xlu0 %703, %v355
  %v705 = vpop.permute.xlu0 %704
  %vm706 = vcmp.eq.s32.totalorder %v705, 1
  %v707 = vsel %vm706, %v696, %v535
  %v708 = vsel %vm706, %v690, %v536
  %v709 = vsel %vm700, %v672, 0.0
  %711 = vrot.lane.b32.xlu0 %v709, 64
  %v712 = vpop.permute.xlu0 %711
  %s714 = scalar_lea.vmem %s6, 16
  %715 = vst.msk [vmem:[%s714] sm:$0xff] %vm208, %v712
  %v716 = vsel %vm706, %v696, 0.0
  %718 = vrot.lane.b32.xlu0 %v716, 64
  %v719 = vpop.permute.xlu0 %718
  %s721 = scalar_lea.vmem %s7, 40
  %722 = vst.msk [vmem:[%s721] sm:$0xff] %vm208, %v719
  %v723 = vld [vmem:[#allocation2 + $0x30] sm:$0xff]
  %v724 = vpack.c.bf16 %v701, %v701
  %726 = vrot.lane.b32.xlu0 %v724, 64
  %v727 = vpop.permute.xlu0 %726
  %v729 = vsel %vm208, %v727, 0
  %731 = vmatprep.subr.bf16.mxu0 0
  %732 = vmatpush1.bf16.msra.mxu0 %v204
  %733 = vmatprep.subr.bf16.mxu0 0
  %734 = vmatpush1.bf16.msra.mxu0 %v205
  %735 = vmatprep.subr.bf16.mxu0 0
  %736 = vmatpush1.bf16.msra.mxu0 0
  %737 = vmatprep.subr.bf16.mxu0 0
  %738 = vmatpush1.bf16.msra.mxu0 0
  %739 = vmatprep.subr.bf16.mxu0 0
  %740 = vmatpush1.bf16.msra.mxu0 0
  %741 = vmatprep.subr.bf16.mxu0 0
  %742 = vmatpush1.bf16.msra.mxu0 0
  %743 = vmatprep.subr.bf16.mxu0 0
  %744 = vmatpush1.bf16.msra.mxu0 0
  %745 = vmatprep.subr.bf16.mxu0 0
  %746 = vmatpush1.bf16.msra.mxu0 0
  %747 = vmatprep.subr.bf16.mxu0 0
  %748 = vmatpush1.bf16.msra.mxu0 0
  %749 = vmatprep.subr.bf16.mxu0 0
  %750 = vmatpush1.bf16.msra.mxu0 0
  %751 = vmatprep.subr.bf16.mxu0 0
  %752 = vmatpush1.bf16.msra.mxu0 0
  %753 = vmatprep.subr.bf16.mxu0 0
  %754 = vmatpush1.bf16.msra.mxu0 0
  %755 = vmatprep.subr.bf16.mxu0 0
  %756 = vmatpush1.bf16.msra.mxu0 0
  %757 = vmatprep.subr.bf16.mxu0 0
  %758 = vmatpush1.bf16.msra.mxu0 0
  %759 = vmatprep.subr.bf16.mxu0 0
  %760 = vmatpush1.bf16.msra.mxu0 0
  %761 = vmatprep.subr.bf16.mxu0 0
  %762 = vmatpush1.bf16.msra.mxu0 0
  %763 = vmatprep.mubr.bf16.mxu0 0
  %764 = vmatmul.mubr.bf16.gmra.mrb[0].mxu0 %v729
  %v765 = vpop.f32.mrb[0].mxu0
  %v766 = vadd.f32 0.0, %v765
  %v767 = vpop.f32.mrb[0].mxu0
  %v768 = vpop.f32.mrb[0].mxu0
  %v769 = vpop.f32.mrb[0].mxu0
  %770 = vdwg.mxu0
  %v771 = vadd.f32 %v723, %v766
  %v772 = vld [vmem:[#allocation2 + $0x48] sm:$0xff]
  %v773 = vpack.c.bf16 %v707, %v707
  %775 = vrot.lane.b32.xlu0 %v773, 64
  %v776 = vpop.permute.xlu0 %775
  %v778 = vsel %vm208, %v776, 0
  %780 = vmatprep.subr.bf16.mxu0 0
  %781 = vmatpush1.bf16.msra.mxu0 %v262
  %782 = vmatprep.subr.bf16.mxu0 0
  %783 = vmatpush1.bf16.msra.mxu0 %v263
  %784 = vmatprep.subr.bf16.mxu0 0
  %785 = vmatpush1.bf16.msra.mxu0 0
  %786 = vmatprep.subr.bf16.mxu0 0
  %787 = vmatpush1.bf16.msra.mxu0 0
  %788 = vmatprep.subr.bf16.mxu0 0
  %789 = vmatpush1.bf16.msra.mxu0 0
  %790 = vmatprep.subr.bf16.mxu0 0
  %791 = vmatpush1.bf16.msra.mxu0 0
  %792 = vmatprep.subr.bf16.mxu0 0
  %793 = vmatpush1.bf16.msra.mxu0 0
  %794 = vmatprep.subr.bf16.mxu0 0
  %795 = vmatpush1.bf16.msra.mxu0 0
  %796 = vmatprep.subr.bf16.mxu0 0
  %797 = vmatpush1.bf16.msra.mxu0 0
  %798 = vmatprep.subr.bf16.mxu0 0
  %799 = vmatpush1.bf16.msra.mxu0 0
  %800 = vmatprep.subr.bf16.mxu0 0
  %801 = vmatpush1.bf16.msra.mxu0 0
  %802 = vmatprep.subr.bf16.mxu0 0
  %803 = vmatpush1.bf16.msra.mxu0 0
  %804 = vmatprep.subr.bf16.mxu0 0
  %805 = vmatpush1.bf16.msra.mxu0 0
  %806 = vmatprep.subr.bf16.mxu0 0
  %807 = vmatpush1.bf16.msra.mxu0 0
  %808 = vmatprep.subr.bf16.mxu0 0
  %809 = vmatpush1.bf16.msra.mxu0 0
  %810 = vmatprep.subr.bf16.mxu0 0
  %811 = vmatpush1.bf16.msra.mxu0 0
  %812 = vmatprep.mubr.bf16.mxu0 0
  %813 = vmatmul.mubr.bf16.gmra.mrb[0].mxu0 %v778
  %v814 = vpop.f32.mrb[0].mxu0
  %v815 = vadd.f32 0.0, %v814
  %v816 = vpop.f32.mrb[0].mxu0
  %v817 = vpop.f32.mrb[0].mxu0
  %v818 = vpop.f32.mrb[0].mxu0
  %819 = vdwg.mxu0
  %v820 = vadd.f32 %v772, %v815
  %v821 = vxor.u32 %v771, 2147483648
  %v822 = vmul.f32 %v821, 1.442695
  %v823 = vpow.pop %v822
  %v824 = vadd.f32 %v823, 1.0
  %v825 = vrcp.pop %v824
  %v826 = vmul.f32 1.0, %v825
  %v827 = vtanh.pop %v771
  %v828 = vmul.f32 %v826, %v702
  %830 = vrot.lane.b32.xlu0 %v827, 32
  %v831 = vpop.permute.xlu0 %830
  %v833 = vmul.f32 %v826, %v831
  %835 = vrot.lane.b32.xlu0 %v833, 32
  %v836 = vpop.permute.xlu0 %835
  %v838 = vadd.f32 %v828, %v836
  %v839 = vtanh.pop %v838
  %841 = vrot.lane.b32.xlu0 %v839, 32
  %v842 = vpop.permute.xlu0 %841
  %v844 = vmul.f32 %v826, %v842
  %v845 = vxor.u32 %v820, 2147483648
  %v846 = vmul.f32 %v845, 1.442695
  %v847 = vpow.pop %v846
  %v848 = vadd.f32 %v847, 1.0
  %v849 = vrcp.pop %v848
  %v850 = vmul.f32 1.0, %v849
  %v851 = vtanh.pop %v820
  %v852 = vmul.f32 %v850, %v708
  %854 = vrot.lane.b32.xlu0 %v851, 32
  %v855 = vpop.permute.xlu0 %854
  %v857 = vmul.f32 %v850, %v855
  %859 = vrot.lane.b32.xlu0 %v857, 32
  %v860 = vpop.permute.xlu0 %859
  %v862 = vadd.f32 %v852, %v860
  %v863 = vtanh.pop %v862
  %865 = vrot.lane.b32.xlu0 %v863, 32
  %v866 = vpop.permute.xlu0 %865
  %v868 = vmul.f32 %v850, %v866
  %869 = vset.pattern.permute.xlu0 3
  %870 = vperm.xlu0 %869, %v355
  %v871 = vpop.permute.xlu0 %870
  %vm872 = vcmp.eq.s32.totalorder %v871, 1
  %v873 = vsel %vm872, %v844, %v701
  %v874 = vsel %vm872, %v838, %v702
  %875 = vset.pattern.permute.xlu0 4
  %876 = vperm.xlu0 %875, %v355
  %v877 = vpop.permute.xlu0 %876
  %vm878 = vcmp.eq.s32.totalorder %v877, 1
  %v879 = vsel %vm878, %v868, %v707
  %v880 = vsel %vm878, %v862, %v708
  %v881 = vsel %vm872, %v844, 0.0
  %883 = vrot.lane.b32.xlu0 %v881, 64
  %v884 = vpop.permute.xlu0 %883
  %s886 = scalar_lea.vmem %s6, 24
  %887 = vst.msk [vmem:[%s886] sm:$0xff] %vm208, %v884
  %v888 = vsel %vm878, %v868, 0.0
  %890 = vrot.lane.b32.xlu0 %v888, 64
  %v891 = vpop.permute.xlu0 %890
  %s893 = scalar_lea.vmem %s7, 32
  %894 = vst.msk [vmem:[%s893] sm:$0xff] %vm208, %v891
  %v895 = vld [vmem:[#allocation2 + $0x40] sm:$0xff]
  %v896 = vpack.c.bf16 %v873, %v873
  %898 = vrot.lane.b32.xlu0 %v896, 64
  %v899 = vpop.permute.xlu0 %898
  %v901 = vsel %vm208, %v899, 0
  %903 = vmatprep.subr.bf16.mxu0 0
  %904 = vmatpush1.bf16.msra.mxu0 %v204
  %905 = vmatprep.subr.bf16.mxu0 0
  %906 = vmatpush1.bf16.msra.mxu0 %v205
  %907 = vmatprep.subr.bf16.mxu0 0
  %908 = vmatpush1.bf16.msra.mxu0 0
  %909 = vmatprep.subr.bf16.mxu0 0
  %910 = vmatpush1.bf16.msra.mxu0 0
  %911 = vmatprep.subr.bf16.mxu0 0
  %912 = vmatpush1.bf16.msra.mxu0 0
  %913 = vmatprep.subr.bf16.mxu0 0
  %914 = vmatpush1.bf16.msra.mxu0 0
  %915 = vmatprep.subr.bf16.mxu0 0
  %916 = vmatpush1.bf16.msra.mxu0 0
  %917 = vmatprep.subr.bf16.mxu0 0
  %918 = vmatpush1.bf16.msra.mxu0 0
  %919 = vmatprep.subr.bf16.mxu0 0
  %920 = vmatpush1.bf16.msra.mxu0 0
  %921 = vmatprep.subr.bf16.mxu0 0
  %922 = vmatpush1.bf16.msra.mxu0 0
  %923 = vmatprep.subr.bf16.mxu0 0
  %924 = vmatpush1.bf16.msra.mxu0 0
  %925 = vmatprep.subr.bf16.mxu0 0
  %926 = vmatpush1.bf16.msra.mxu0 0
  %927 = vmatprep.subr.bf16.mxu0 0
  %928 = vmatpush1.bf16.msra.mxu0 0
  %929 = vmatprep.subr.bf16.mxu0 0
  %930 = vmatpush1.bf16.msra.mxu0 0
  %931 = vmatprep.subr.bf16.mxu0 0
  %932 = vmatpush1.bf16.msra.mxu0 0
  %933 = vmatprep.subr.bf16.mxu0 0
  %934 = vmatpush1.bf16.msra.mxu0 0
  %935 = vmatprep.mubr.bf16.mxu0 0
  %936 = vmatmul.mubr.bf16.gmra.mrb[0].mxu0 %v901
  %v937 = vpop.f32.mrb[0].mxu0
  %v938 = vadd.f32 0.0, %v937
  %v939 = vpop.f32.mrb[0].mxu0
  %v940 = vpop.f32.mrb[0].mxu0
  %v941 = vpop.f32.mrb[0].mxu0
  %942 = vdwg.mxu0
  %v943 = vadd.f32 %v895, %v938
  %v944 = vld [vmem:[#allocation2 + $0x38] sm:$0xff]
  %v945 = vpack.c.bf16 %v879, %v879
  %947 = vrot.lane.b32.xlu0 %v945, 64
  %v948 = vpop.permute.xlu0 %947
  %v950 = vsel %vm208, %v948, 0
  %952 = vmatprep.subr.bf16.mxu0 0
  %953 = vmatpush1.bf16.msra.mxu0 %v262
  %954 = vmatprep.subr.bf16.mxu0 0
  %955 = vmatpush1.bf16.msra.mxu0 %v263
  %956 = vmatprep.subr.bf16.mxu0 0
  %957 = vmatpush1.bf16.msra.mxu0 0
  %958 = vmatprep.subr.bf16.mxu0 0
  %959 = vmatpush1.bf16.msra.mxu0 0
  %960 = vmatprep.subr.bf16.mxu0 0
  %961 = vmatpush1.bf16.msra.mxu0 0
  %962 = vmatprep.subr.bf16.mxu0 0
  %963 = vmatpush1.bf16.msra.mxu0 0
  %964 = vmatprep.subr.bf16.mxu0 0
  %965 = vmatpush1.bf16.msra.mxu0 0
  %966 = vmatprep.subr.bf16.mxu0 0
  %967 = vmatpush1.bf16.msra.mxu0 0
  %968 = vmatprep.subr.bf16.mxu0 0
  %969 = vmatpush1.bf16.msra.mxu0 0
  %970 = vmatprep.subr.bf16.mxu0 0
  %971 = vmatpush1.bf16.msra.mxu0 0
  %972 = vmatprep.subr.bf16.mxu0 0
  %973 = vmatpush1.bf16.msra.mxu0 0
  %974 = vmatprep.subr.bf16.mxu0 0
  %975 = vmatpush1.bf16.msra.mxu0 0
  %976 = vmatprep.subr.bf16.mxu0 0
  %977 = vmatpush1.bf16.msra.mxu0 0
  %978 = vmatprep.subr.bf16.mxu0 0
  %979 = vmatpush1.bf16.msra.mxu0 0
  %980 = vmatprep.subr.bf16.mxu0 0
  %981 = vmatpush1.bf16.msra.mxu0 0
  %982 = vmatprep.subr.bf16.mxu0 0
  %983 = vmatpush1.bf16.msra.mxu0 0
  %984 = vmatprep.mubr.bf16.mxu0 0
  %985 = vmatmul.mubr.bf16.gmra.mrb[0].mxu0 %v950
  %v986 = vpop.f32.mrb[0].mxu0
  %v987 = vadd.f32 0.0, %v986
  %v988 = vpop.f32.mrb[0].mxu0
  %v989 = vpop.f32.mrb[0].mxu0
  %v990 = vpop.f32.mrb[0].mxu0
  %991 = vdwg.mxu0
  %v992 = vadd.f32 %v944, %v987
  %v993 = vxor.u32 %v943, 2147483648
  %v994 = vmul.f32 %v993, 1.442695
  %v995 = vpow.pop %v994
  %v996 = vadd.f32 %v995, 1.0
  %v997 = vrcp.pop %v996
  %v998 = vmul.f32 1.0, %v997
  %v999 = vtanh.pop %v943
  %v1000 = vmul.f32 %v998, %v874
  %1002 = vrot.lane.b32.xlu0 %v999, 32
  %v1003 = vpop.permute.xlu0 %1002
  %v1005 = vmul.f32 %v998, %v1003
  %1007 = vrot.lane.b32.xlu0 %v1005, 32
  %v1008 = vpop.permute.xlu0 %1007
  %v1010 = vadd.f32 %v1000, %v1008
  %v1011 = vtanh.pop %v1010
  %1013 = vrot.lane.b32.xlu0 %v1011, 32
  %v1014 = vpop.permute.xlu0 %1013
  %v1016 = vmul.f32 %v998, %v1014
  %v1017 = vxor.u32 %v992, 2147483648
  %v1018 = vmul.f32 %v1017, 1.442695
  %v1019 = vpow.pop %v1018
  %v1020 = vadd.f32 %v1019, 1.0
  %v1021 = vrcp.pop %v1020
  %v1022 = vmul.f32 1.0, %v1021
  %v1023 = vtanh.pop %v992
  %v1024 = vmul.f32 %v1022, %v880
  %1026 = vrot.lane.b32.xlu0 %v1023, 32
  %v1027 = vpop.permute.xlu0 %1026
  %v1029 = vmul.f32 %v1022, %v1027
  %1031 = vrot.lane.b32.xlu0 %v1029, 32
  %v1032 = vpop.permute.xlu0 %1031
  %v1034 = vadd.f32 %v1024, %v1032
  %v1035 = vtanh.pop %v1034
  %1037 = vrot.lane.b32.xlu0 %v1035, 32
  %v1038 = vpop.permute.xlu0 %1037
  %v1040 = vmul.f32 %v1022, %v1038
  %v1041 = vsel %vm878, %v1016, %v873
  %v1042 = vsel %vm878, %v1010, %v874
  %v1043 = vsel %vm872, %v1040, %v879
  %v1044 = vsel %vm872, %v1034, %v880
  %v1045 = vsel %vm878, %v1016, 0.0
  %1047 = vrot.lane.b32.xlu0 %v1045, 64
  %v1048 = vpop.permute.xlu0 %1047
  %s1050 = scalar_lea.vmem %s6, 32
  %1051 = vst.msk [vmem:[%s1050] sm:$0xff] %vm208, %v1048
  %v1052 = vsel %vm872, %v1040, 0.0
  %1054 = vrot.lane.b32.xlu0 %v1052, 64
  %v1055 = vpop.permute.xlu0 %1054
  %s1057 = scalar_lea.vmem %s7, 24
  %1058 = vst.msk [vmem:[%s1057] sm:$0xff] %vm208, %v1055
  %v1059 = vld [vmem:[#allocation2 + $0x50] sm:$0xff]
  %v1060 = vpack.c.bf16 %v1041, %v1041
  %1062 = vrot.lane.b32.xlu0 %v1060, 64
  %v1063 = vpop.permute.xlu0 %1062
  %v1065 = vsel %vm208, %v1063, 0
  %1067 = vmatprep.subr.bf16.mxu0 0
  %1068 = vmatpush1.bf16.msra.mxu0 %v204
  %1069 = vmatprep.subr.bf16.mxu0 0
  %1070 = vmatpush1.bf16.msra.mxu0 %v205
  %1071 = vmatprep.subr.bf16.mxu0 0
  %1072 = vmatpush1.bf16.msra.mxu0 0
  %1073 = vmatprep.subr.bf16.mxu0 0
  %1074 = vmatpush1.bf16.msra.mxu0 0
  %1075 = vmatprep.subr.bf16.mxu0 0
  %1076 = vmatpush1.bf16.msra.mxu0 0
  %1077 = vmatprep.subr.bf16.mxu0 0
  %1078 = vmatpush1.bf16.msra.mxu0 0
  %1079 = vmatprep.subr.bf16.mxu0 0
  %1080 = vmatpush1.bf16.msra.mxu0 0
  %1081 = vmatprep.subr.bf16.mxu0 0
  %1082 = vmatpush1.bf16.msra.mxu0 0
  %1083 = vmatprep.subr.bf16.mxu0 0
  %1084 = vmatpush1.bf16.msra.mxu0 0
  %1085 = vmatprep.subr.bf16.mxu0 0
  %1086 = vmatpush1.bf16.msra.mxu0 0
  %1087 = vmatprep.subr.bf16.mxu0 0
  %1088 = vmatpush1.bf16.msra.mxu0 0
  %1089 = vmatprep.subr.bf16.mxu0 0
  %1090 = vmatpush1.bf16.msra.mxu0 0
  %1091 = vmatprep.subr.bf16.mxu0 0
  %1092 = vmatpush1.bf16.msra.mxu0 0
  %1093 = vmatprep.subr.bf16.mxu0 0
  %1094 = vmatpush1.bf16.msra.mxu0 0
  %1095 = vmatprep.subr.bf16.mxu0 0
  %1096 = vmatpush1.bf16.msra.mxu0 0
  %1097 = vmatprep.subr.bf16.mxu0 0
  %1098 = vmatpush1.bf16.msra.mxu0 0
  %1099 = vmatprep.mubr.bf16.mxu0 0
  %1100 = vmatmul.mubr.bf16.gmra.mrb[0].mxu0 %v1065
  %v1101 = vpop.f32.mrb[0].mxu0
  %v1102 = vadd.f32 0.0, %v1101
  %v1103 = vpop.f32.mrb[0].mxu0
  %v1104 = vpop.f32.mrb[0].mxu0
  %v1105 = vpop.f32.mrb[0].mxu0
  %1106 = vdwg.mxu0
  %v1107 = vadd.f32 %v1059, %v1102
  %v1108 = vld [vmem:[#allocation2 + $0x28] sm:$0xff]
  %v1109 = vpack.c.bf16 %v1043, %v1043
  %1111 = vrot.lane.b32.xlu0 %v1109, 64
  %v1112 = vpop.permute.xlu0 %1111
  %v1114 = vsel %vm208, %v1112, 0
  %1116 = vmatprep.subr.bf16.mxu0 0
  %1117 = vmatpush1.bf16.msra.mxu0 %v262
  %1118 = vmatprep.subr.bf16.mxu0 0
  %1119 = vmatpush1.bf16.msra.mxu0 %v263
  %1120 = vmatprep.subr.bf16.mxu0 0
  %1121 = vmatpush1.bf16.msra.mxu0 0
  %1122 = vmatprep.subr.bf16.mxu0 0
  %1123 = vmatpush1.bf16.msra.mxu0 0
  %1124 = vmatprep.subr.bf16.mxu0 0
  %1125 = vmatpush1.bf16.msra.mxu0 0
  %1126 = vmatprep.subr.bf16.mxu0 0
  %1127 = vmatpush1.bf16.msra.mxu0 0
  %1128 = vmatprep.subr.bf16.mxu0 0
  %1129 = vmatpush1.bf16.msra.mxu0 0
  %1130 = vmatprep.subr.bf16.mxu0 0
  %1131 = vmatpush1.bf16.msra.mxu0 0
  %1132 = vmatprep.subr.bf16.mxu0 0
  %1133 = vmatpush1.bf16.msra.mxu0 0
  %1134 = vmatprep.subr.bf16.mxu0 0
  %1135 = vmatpush1.bf16.msra.mxu0 0
  %1136 = vmatprep.subr.bf16.mxu0 0
  %1137 = vmatpush1.bf16.msra.mxu0 0
  %1138 = vmatprep.subr.bf16.mxu0 0
  %1139 = vmatpush1.bf16.msra.mxu0 0
  %1140 = vmatprep.subr.bf16.mxu0 0
  %1141 = vmatpush1.bf16.msra.mxu0 0
  %1142 = vmatprep.subr.bf16.mxu0 0
  %1143 = vmatpush1.bf16.msra.mxu0 0
  %1144 = vmatprep.subr.bf16.mxu0 0
  %1145 = vmatpush1.bf16.msra.mxu0 0
  %1146 = vmatprep.subr.bf16.mxu0 0
  %1147 = vmatpush1.bf16.msra.mxu0 0
  %1148 = vmatprep.mubr.bf16.mxu0 0
  %1149 = vmatmul.mubr.bf16.gmra.mrb[0].mxu0 %v1114
  %v1150 = vpop.f32.mrb[0].mxu0
  %v1151 = vadd.f32 0.0, %v1150
  %v1152 = vpop.f32.mrb[0].mxu0
  %v1153 = vpop.f32.mrb[0].mxu0
  %v1154 = vpop.f32.mrb[0].mxu0
  %1155 = vdwg.mxu0
  %v1156 = vadd.f32 %v1108, %v1151
  %v1157 = vxor.u32 %v1107, 2147483648
  %v1158 = vmul.f32 %v1157, 1.442695
  %v1159 = vpow.pop %v1158
  %v1160 = vadd.f32 %v1159, 1.0
  %v1161 = vrcp.pop %v1160
  %v1162 = vmul.f32 1.0, %v1161
  %v1163 = vtanh.pop %v1107
  %v1164 = vmul.f32 %v1162, %v1042
  %1166 = vrot.lane.b32.xlu0 %v1163, 32
  %v1167 = vpop.permute.xlu0 %1166
  %v1169 = vmul.f32 %v1162, %v1167
  %1171 = vrot.lane.b32.xlu0 %v1169, 32
  %v1172 = vpop.permute.xlu0 %1171
  %v1174 = vadd.f32 %v1164, %v1172
  %v1175 = vtanh.pop %v1174
  %1177 = vrot.lane.b32.xlu0 %v1175, 32
  %v1178 = vpop.permute.xlu0 %1177
  %v1180 = vmul.f32 %v1162, %v1178
  %v1181 = vxor.u32 %v1156, 2147483648
  %v1182 = vmul.f32 %v1181, 1.442695
  %v1183 = vpow.pop %v1182
  %v1184 = vadd.f32 %v1183, 1.0
  %v1185 = vrcp.pop %v1184
  %v1186 = vmul.f32 1.0, %v1185
  %v1187 = vtanh.pop %v1156
  %v1188 = vmul.f32 %v1186, %v1044
  %1190 = vrot.lane.b32.xlu0 %v1187, 32
  %v1191 = vpop.permute.xlu0 %1190
  %v1193 = vmul.f32 %v1186, %v1191
  %1195 = vrot.lane.b32.xlu0 %v1193, 32
  %v1196 = vpop.permute.xlu0 %1195
  %v1198 = vadd.f32 %v1188, %v1196
  %v1199 = vtanh.pop %v1198
  %1201 = vrot.lane.b32.xlu0 %v1199, 32
  %v1202 = vpop.permute.xlu0 %1201
  %v1204 = vmul.f32 %v1186, %v1202
  %v1205 = vsel %vm706, %v1180, %v1041
  %v1206 = vsel %vm706, %v1174, %v1042
  %v1207 = vsel %vm700, %v1204, %v1043
  %v1208 = vsel %vm700, %v1198, %v1044
  %v1209 = vsel %vm706, %v1180, 0.0
  %1211 = vrot.lane.b32.xlu0 %v1209, 64
  %v1212 = vpop.permute.xlu0 %1211
  %s1214 = scalar_lea.vmem %s6, 40
  %1215 = vst.msk [vmem:[%s1214] sm:$0xff] %vm208, %v1212
  %v1216 = vsel %vm700, %v1204, 0.0
  %1218 = vrot.lane.b32.xlu0 %v1216, 64
  %v1219 = vpop.permute.xlu0 %1218
  %s1221 = scalar_lea.vmem %s7, 16
  %1222 = vst.msk [vmem:[%s1221] sm:$0xff] %vm208, %v1219
  %v1223 = vld [vmem:[#allocation2 + $0x60] sm:$0xff]
  %v1224 = vpack.c.bf16 %v1205, %v1205
  %1226 = vrot.lane.b32.xlu0 %v1224, 64
  %v1227 = vpop.permute.xlu0 %1226
  %v1229 = vsel %vm208, %v1227, 0
  %1231 = vmatprep.subr.bf16.mxu0 0
  %1232 = vmatpush1.bf16.msra.mxu0 %v204
  %1233 = vmatprep.subr.bf16.mxu0 0
  %1234 = vmatpush1.bf16.msra.mxu0 %v205
  %1235 = vmatprep.subr.bf16.mxu0 0
  %1236 = vmatpush1.bf16.msra.mxu0 0
  %1237 = vmatprep.subr.bf16.mxu0 0
  %1238 = vmatpush1.bf16.msra.mxu0 0
  %1239 = vmatprep.subr.bf16.mxu0 0
  %1240 = vmatpush1.bf16.msra.mxu0 0
  %1241 = vmatprep.subr.bf16.mxu0 0
  %1242 = vmatpush1.bf16.msra.mxu0 0
  %1243 = vmatprep.subr.bf16.mxu0 0
  %1244 = vmatpush1.bf16.msra.mxu0 0
  %1245 = vmatprep.subr.bf16.mxu0 0
  %1246 = vmatpush1.bf16.msra.mxu0 0
  %1247 = vmatprep.subr.bf16.mxu0 0
  %1248 = vmatpush1.bf16.msra.mxu0 0
  %1249 = vmatprep.subr.bf16.mxu0 0
  %1250 = vmatpush1.bf16.msra.mxu0 0
  %1251 = vmatprep.subr.bf16.mxu0 0
  %1252 = vmatpush1.bf16.msra.mxu0 0
  %1253 = vmatprep.subr.bf16.mxu0 0
  %1254 = vmatpush1.bf16.msra.mxu0 0
  %1255 = vmatprep.subr.bf16.mxu0 0
  %1256 = vmatpush1.bf16.msra.mxu0 0
  %1257 = vmatprep.subr.bf16.mxu0 0
  %1258 = vmatpush1.bf16.msra.mxu0 0
  %1259 = vmatprep.subr.bf16.mxu0 0
  %1260 = vmatpush1.bf16.msra.mxu0 0
  %1261 = vmatprep.subr.bf16.mxu0 0
  %1262 = vmatpush1.bf16.msra.mxu0 0
  %1263 = vmatprep.mubr.bf16.mxu0 0
  %1264 = vmatmul.mubr.bf16.gmra.mrb[0].mxu0 %v1229
  %v1265 = vpop.f32.mrb[0].mxu0
  %v1266 = vadd.f32 0.0, %v1265
  %v1267 = vpop.f32.mrb[0].mxu0
  %v1268 = vpop.f32.mrb[0].mxu0
  %v1269 = vpop.f32.mrb[0].mxu0
  %1270 = vdwg.mxu0
  %v1271 = vadd.f32 %v1223, %v1266
  %v1272 = vld [vmem:[#allocation2 + $0x18] sm:$0xff]
  %v1273 = vpack.c.bf16 %v1207, %v1207
  %1275 = vrot.lane.b32.xlu0 %v1273, 64
  %v1276 = vpop.permute.xlu0 %1275
  %v1278 = vsel %vm208, %v1276, 0
  %1280 = vmatprep.subr.bf16.mxu0 0
  %1281 = vmatpush1.bf16.msra.mxu0 %v262
  %1282 = vmatprep.subr.bf16.mxu0 0
  %1283 = vmatpush1.bf16.msra.mxu0 %v263
  %1284 = vmatprep.subr.bf16.mxu0 0
  %1285 = vmatpush1.bf16.msra.mxu0 0
  %1286 = vmatprep.subr.bf16.mxu0 0
  %1287 = vmatpush1.bf16.msra.mxu0 0
  %1288 = vmatprep.subr.bf16.mxu0 0
  %1289 = vmatpush1.bf16.msra.mxu0 0
  %1290 = vmatprep.subr.bf16.mxu0 0
  %1291 = vmatpush1.bf16.msra.mxu0 0
  %1292 = vmatprep.subr.bf16.mxu0 0
  %1293 = vmatpush1.bf16.msra.mxu0 0
  %1294 = vmatprep.subr.bf16.mxu0 0
  %1295 = vmatpush1.bf16.msra.mxu0 0
  %1296 = vmatprep.subr.bf16.mxu0 0
  %1297 = vmatpush1.bf16.msra.mxu0 0
  %1298 = vmatprep.subr.bf16.mxu0 0
  %1299 = vmatpush1.bf16.msra.mxu0 0
  %1300 = vmatprep.subr.bf16.mxu0 0
  %1301 = vmatpush1.bf16.msra.mxu0 0
  %1302 = vmatprep.subr.bf16.mxu0 0
  %1303 = vmatpush1.bf16.msra.mxu0 0
  %1304 = vmatprep.subr.bf16.mxu0 0
  %1305 = vmatpush1.bf16.msra.mxu0 0
  %1306 = vmatprep.subr.bf16.mxu0 0
  %1307 = vmatpush1.bf16.msra.mxu0 0
  %1308 = vmatprep.subr.bf16.mxu0 0
  %1309 = vmatpush1.bf16.msra.mxu0 0
  %1310 = vmatprep.subr.bf16.mxu0 0
  %1311 = vmatpush1.bf16.msra.mxu0 0
  %1312 = vmatprep.mubr.bf16.mxu0 0
  %1313 = vmatmul.mubr.bf16.gmra.mrb[0].mxu0 %v1278
  %v1314 = vpop.f32.mrb[0].mxu0
  %v1315 = vadd.f32 0.0, %v1314
  %v1316 = vpop.f32.mrb[0].mxu0
  %v1317 = vpop.f32.mrb[0].mxu0
  %v1318 = vpop.f32.mrb[0].mxu0
  %1319 = vdwg.mxu0
  %v1320 = vadd.f32 %v1272, %v1315
  %v1321 = vxor.u32 %v1271, 2147483648
  %v1322 = vmul.f32 %v1321, 1.442695
  %v1323 = vpow.pop %v1322
  %v1324 = vadd.f32 %v1323, 1.0
  %v1325 = vrcp.pop %v1324
  %v1326 = vmul.f32 1.0, %v1325
  %v1327 = vtanh.pop %v1271
  %v1328 = vmul.f32 %v1326, %v1206
  %1330 = vrot.lane.b32.xlu0 %v1327, 32
  %v1331 = vpop.permute.xlu0 %1330
  %v1333 = vmul.f32 %v1326, %v1331
  %1335 = vrot.lane.b32.xlu0 %v1333, 32
  %v1336 = vpop.permute.xlu0 %1335
  %v1338 = vadd.f32 %v1328, %v1336
  %v1339 = vtanh.pop %v1338
  %1341 = vrot.lane.b32.xlu0 %v1339, 32
  %v1342 = vpop.permute.xlu0 %1341
  %v1344 = vmul.f32 %v1326, %v1342
  %v1345 = vxor.u32 %v1320, 2147483648
  %v1346 = vmul.f32 %v1345, 1.442695
  %v1347 = vpow.pop %v1346
  %v1348 = vadd.f32 %v1347, 1.0
  %v1349 = vrcp.pop %v1348
  %v1350 = vmul.f32 1.0, %v1349
  %v1351 = vtanh.pop %v1320
  %v1352 = vmul.f32 %v1350, %v1208
  %1354 = vrot.lane.b32.xlu0 %v1351, 32
  %v1355 = vpop.permute.xlu0 %1354
  %v1357 = vmul.f32 %v1350, %v1355
  %1359 = vrot.lane.b32.xlu0 %v1357, 32
  %v1360 = vpop.permute.xlu0 %1359
  %v1362 = vadd.f32 %v1352, %v1360
  %v1363 = vtanh.pop %v1362
  %1365 = vrot.lane.b32.xlu0 %v1363, 32
  %v1366 = vpop.permute.xlu0 %1365
  %v1368 = vmul.f32 %v1350, %v1366
  %v1369 = vsel %vm534, %v1344, %v1205
  %v1370 = vsel %vm534, %v1338, %v1206
  %v1371 = vsel %vm528, %v1368, %v1207
  %v1372 = vsel %vm528, %v1362, %v1208
  %v1373 = vsel %vm534, %v1344, 0.0
  %1375 = vrot.lane.b32.xlu0 %v1373, 64
  %v1376 = vpop.permute.xlu0 %1375
  %s1378 = scalar_lea.vmem %s6, 48
  %1379 = vst.msk [vmem:[%s1378] sm:$0xff] %vm208, %v1376
  %v1380 = vsel %vm528, %v1368, 0.0
  %1382 = vrot.lane.b32.xlu0 %v1380, 64
  %v1383 = vpop.permute.xlu0 %1382
  %s1385 = scalar_lea.vmem %s7, 8
  %1386 = vst.msk [vmem:[%s1385] sm:$0xff] %vm208, %v1383
  %v1387 = vld [vmem:[#allocation2 + $0x70] sm:$0xff]
  %v1388 = vpack.c.bf16 %v1369, %v1369
  %1390 = vrot.lane.b32.xlu0 %v1388, 64
  %v1391 = vpop.permute.xlu0 %1390
  %v1393 = vsel %vm208, %v1391, 0
  %1395 = vmatprep.subr.bf16.mxu0 0
  %1396 = vmatpush1.bf16.msra.mxu0 %v204
  %1397 = vmatprep.subr.bf16.mxu0 0
  %1398 = vmatpush1.bf16.msra.mxu0 %v205
  %1399 = vmatprep.subr.bf16.mxu0 0
  %1400 = vmatpush1.bf16.msra.mxu0 0
  %1401 = vmatprep.subr.bf16.mxu0 0
  %1402 = vmatpush1.bf16.msra.mxu0 0
  %1403 = vmatprep.subr.bf16.mxu0 0
  %1404 = vmatpush1.bf16.msra.mxu0 0
  %1405 = vmatprep.subr.bf16.mxu0 0
  %1406 = vmatpush1.bf16.msra.mxu0 0
  %1407 = vmatprep.subr.bf16.mxu0 0
  %1408 = vmatpush1.bf16.msra.mxu0 0
  %1409 = vmatprep.subr.bf16.mxu0 0
  %1410 = vmatpush1.bf16.msra.mxu0 0
  %1411 = vmatprep.subr.bf16.mxu0 0
  %1412 = vmatpush1.bf16.msra.mxu0 0
  %1413 = vmatprep.subr.bf16.mxu0 0
  %1414 = vmatpush1.bf16.msra.mxu0 0
  %1415 = vmatprep.subr.bf16.mxu0 0
  %1416 = vmatpush1.bf16.msra.mxu0 0
  %1417 = vmatprep.subr.bf16.mxu0 0
  %1418 = vmatpush1.bf16.msra.mxu0 0
  %1419 = vmatprep.subr.bf16.mxu0 0
  %1420 = vmatpush1.bf16.msra.mxu0 0
  %1421 = vmatprep.subr.bf16.mxu0 0
  %1422 = vmatpush1.bf16.msra.mxu0 0
  %1423 = vmatprep.subr.bf16.mxu0 0
  %1424 = vmatpush1.bf16.msra.mxu0 0
  %1425 = vmatprep.subr.bf16.mxu0 0
  %1426 = vmatpush1.bf16.msra.mxu0 0
  %1427 = vmatprep.mubr.bf16.mxu0 0
  %1428 = vmatmul.mubr.bf16.gmra.mrb[0].mxu0 %v1393
  %v1429 = vpop.f32.mrb[0].mxu0
  %v1430 = vadd.f32 0.0, %v1429
  %v1431 = vpop.f32.mrb[0].mxu0
  %v1432 = vpop.f32.mrb[0].mxu0
  %v1433 = vpop.f32.mrb[0].mxu0
  %1434 = vdwg.mxu0
  %v1435 = vadd.f32 %v1387, %v1430
  %v1436 = vld [vmem:[#allocation2 + $0x8] sm:$0xff]
  %v1437 = vpack.c.bf16 %v1371, %v1371
  %1439 = vrot.lane.b32.xlu0 %v1437, 64
  %v1440 = vpop.permute.xlu0 %1439
  %v1442 = vsel %vm208, %v1440, 0
  %1444 = vmatprep.subr.bf16.mxu0 0
  %1445 = vmatpush1.bf16.msra.mxu0 %v262
  %1446 = vmatprep.subr.bf16.mxu0 0
  %1447 = vmatpush1.bf16.msra.mxu0 %v263
  %1448 = vmatprep.subr.bf16.mxu0 0
  %1449 = vmatpush1.bf16.msra.mxu0 0
  %1450 = vmatprep.subr.bf16.mxu0 0
  %1451 = vmatpush1.bf16.msra.mxu0 0
  %1452 = vmatprep.subr.bf16.mxu0 0
  %1453 = vmatpush1.bf16.msra.mxu0 0
  %1454 = vmatprep.subr.bf16.mxu0 0
  %1455 = vmatpush1.bf16.msra.mxu0 0
  %1456 = vmatprep.subr.bf16.mxu0 0
  %1457 = vmatpush1.bf16.msra.mxu0 0
  %1458 = vmatprep.subr.bf16.mxu0 0
  %1459 = vmatpush1.bf16.msra.mxu0 0
  %1460 = vmatprep.subr.bf16.mxu0 0
  %1461 = vmatpush1.bf16.msra.mxu0 0
  %1462 = vmatprep.subr.bf16.mxu0 0
  %1463 = vmatpush1.bf16.msra.mxu0 0
  %1464 = vmatprep.subr.bf16.mxu0 0
  %1465 = vmatpush1.bf16.msra.mxu0 0
  %1466 = vmatprep.subr.bf16.mxu0 0
  %1467 = vmatpush1.bf16.msra.mxu0 0
  %1468 = vmatprep.subr.bf16.mxu0 0
  %1469 = vmatpush1.bf16.msra.mxu0 0
  %1470 = vmatprep.subr.bf16.mxu0 0
  %1471 = vmatpush1.bf16.msra.mxu0 0
  %1472 = vmatprep.subr.bf16.mxu0 0
  %1473 = vmatpush1.bf16.msra.mxu0 0
  %1474 = vmatprep.subr.bf16.mxu0 0
  %1475 = vmatpush1.bf16.msra.mxu0 0
  %1476 = vmatprep.mubr.bf16.mxu0 0
  %1477 = vmatmul.mubr.bf16.gmra.mrb[0].mxu0 %v1442
  %v1478 = vpop.f32.mrb[0].mxu0
  %v1479 = vadd.f32 0.0, %v1478
  %v1480 = vpop.f32.mrb[0].mxu0
  %v1481 = vpop.f32.mrb[0].mxu0
  %v1482 = vpop.f32.mrb[0].mxu0
  %1483 = vdwg.mxu0
  %v1484 = vadd.f32 %v1436, %v1479
  %v1485 = vxor.u32 %v1435, 2147483648
  %v1486 = vmul.f32 %v1485, 1.442695
  %v1487 = vpow.pop %v1486
  %v1488 = vadd.f32 %v1487, 1.0
  %v1489 = vrcp.pop %v1488
  %v1490 = vmul.f32 1.0, %v1489
  %v1491 = vtanh.pop %v1435
  %v1492 = vmul.f32 %v1490, %v1370
  %1494 = vrot.lane.b32.xlu0 %v1491, 32
  %v1495 = vpop.permute.xlu0 %1494
  %v1497 = vmul.f32 %v1490, %v1495
  %1499 = vrot.lane.b32.xlu0 %v1497, 32
  %v1500 = vpop.permute.xlu0 %1499
  %v1502 = vadd.f32 %v1492, %v1500
  %v1503 = vtanh.pop %v1502
  %1505 = vrot.lane.b32.xlu0 %v1503, 32
  %v1506 = vpop.permute.xlu0 %1505
  %v1508 = vmul.f32 %v1490, %v1506
  %v1509 = vxor.u32 %v1484, 2147483648
  %v1510 = vmul.f32 %v1509, 1.442695
  %v1511 = vpow.pop %v1510
  %v1512 = vadd.f32 %v1511, 1.0
  %v1513 = vrcp.pop %v1512
  %v1514 = vmul.f32 1.0, %v1513
  %v1515 = vtanh.pop %v1484
  %v1516 = vmul.f32 %v1514, %v1372
  %1518 = vrot.lane.b32.xlu0 %v1515, 32
  %v1519 = vpop.permute.xlu0 %1518
  %v1521 = vmul.f32 %v1514, %v1519
  %1523 = vrot.lane.b32.xlu0 %v1521, 32
  %v1524 = vpop.permute.xlu0 %1523
  %v1526 = vadd.f32 %v1516, %v1524
  %v1527 = vtanh.pop %v1526
  %1529 = vrot.lane.b32.xlu0 %v1527, 32
  %v1530 = vpop.permute.xlu0 %1529
  %v1532 = vmul.f32 %v1514, %v1530
  %v1533 = vsel %vm365, %v1508, 0.0
  %1535 = vrot.lane.b32.xlu0 %v1533, 64
  %v1536 = vpop.permute.xlu0 %1535
  %s1538 = scalar_lea.vmem %s6, 56
  %1539 = vst.msk [vmem:[%s1538] sm:$0xff] %vm208, %v1536
  %v1540 = vsel %vm359, %v1532, 0.0
  %1542 = vrot.lane.b32.xlu0 %v1540, 64
  %v1543 = vpop.permute.xlu0 %1542
  %1545 = vst.msk [vmem:[%s7] sm:$0xff] %vm208, %v1543
  // Predicated region
  $region26: #{encoder_forward.1} parent=0 // pred_check
    _
  $region27: #{encoder_forward.1} parent=0 // pred_check_branch
    %1547 = sbr.rel (0) target = $region29
  $region28: #{encoder_forward.1} parent=0 // pred_region
    _
  $region29: #{encoder_forward.1} parent=0 // pred_fallthru
    _
  // Predicated region
  $region30: #{encoder_forward.1} parent=0 // pred_check
    _
  $region31: #{encoder_forward.1} parent=0 // pred_check_branch
    %1549 = sbr.rel (0) target = $region33
  $region32: #{encoder_forward.1} parent=0 // pred_region
    _
  $region33: #{encoder_forward.1} parent=0 // pred_fallthru
    _
  // Predicated region
  $region34: #{encoder_forward.1} parent=0 // pred_check
    _
  $region35: #{encoder_forward.1} parent=0 // pred_check_branch
    %1551 = sbr.rel (0) target = $region37
  $region36: #{encoder_forward.1} parent=0 // pred_region
    _
  $region37: #{encoder_forward.1} parent=0 // pred_fallthru
    _
  // Predicated region
  $region38: #{encoder_forward.1} parent=0 // pred_check
    _
  $region39: #{encoder_forward.1} parent=0 // pred_check_branch
    %1553 = sbr.rel (0) target = $region41
  $region40: #{encoder_forward.1} parent=0 // pred_region
    _
  $region41: #{encoder_forward.1} parent=0 // pred_fallthru
    _

</llo_original>
